<compile_context>
chip_gen: v7x
topology: tpu7x:2x2x1
jax: 0.10.0
libtpu: 0.0.40
codegen_flags: <defaults>
</compile_context>

<pallas_src>
import functools
import math

import numpy as np
import jax
import jax.numpy as jnp
from jax.experimental import pallas as pl
from jax.experimental.pallas import tpu as pltpu


def _upsample_conv_kernel(x_ref, dwp_ref, a_ref, o_ref, *, KW, Wo,
                          negative_slope, activation):
    """One batch element per grid step.

    x_ref:   (1, Cin*H, W)          original low-res input, rows ordered (ci, i)
    dwp_ref: (W, Wo + 2*pad)        constant 0/1 width-duplication + h-halo matrix
    a_ref:   (KW, Cout*Ho, Cin*H)   folded weights (kh taps, vertical nearest
                                    duplication and vertical zero pad absorbed)
    o_ref:   (1, Cout*Ho, Wo)       output rows ordered (co, y), lanes = x
    """
    # In-kernel nearest width-upsample (+ horizontal zero halo) as one tiny MXU
    # matmul: xwp[(ci,i), t] = X[ci, i, (t-pad)//s] inside the halo, 0 outside.
    xwp = jnp.dot(x_ref[0], dwp_ref[...])                     # (Cin*H, Wo+2*pad)

    # KW accumulating dots; each slab xwp[:, kw:kw+Wo] is a small lane-shifted
    # register view -- no im2col scratch / VMEM round trip, no per-tap masks.
    acc = None
    for kw in range(KW):
        piece = xwp[:, kw:kw + Wo]                             # (Cin*H, Wo)
        contrib = jnp.dot(a_ref[kw], piece,
                          preferred_element_type=jnp.float32)  # (Cout*Ho, Wo) f32
        acc = contrib if acc is None else acc + contrib

    if activation:
        acc = jnp.where(acc >= 0, acc, acc * negative_slope)   # LeakyReLU in f32

    o_ref[0] = acc.astype(o_ref.dtype)


def _padded_block_bytes(shape, dtype, buffers=2):
    """Rough (8,128)-padded VMEM footprint of one (double-buffered) block."""
    s = list(shape)
    if s:
        s[-1] = -(-s[-1] // 128) * 128
    if len(s) >= 2:
        s[-2] = -(-s[-2] // 8) * 8
    return buffers * int(np.prod(s)) * np.dtype(dtype).itemsize


def upsample_interpolate_conv2d(x, weight, *, upscale_factor=2,
                                negative_slope=0.2, activation=True,
                                compute_dtype=None):
    """x: (N, Cin, H, W) NCHW.  weight: (Cout, Cin, KH, KW) (PyTorch OIHW).

    Returns (N, Cout, H*upscale, W*upscale) NCHW, matching the PyTorch module.
    compute_dtype: None (=x.dtype, f32) is right for v5e and for tight accuracy;
    jnp.bfloat16 is the fast path on v6e/v7x (f32 accumulation preserved).
    """
    N, Cin, H, W = x.shape
    Cout, Cin_w, KH, KW = weight.shape
    assert Cin == Cin_w
    assert KH == KW and KH % 2 == 1, "square, odd kernel expected"
    s = int(upscale_factor)
    assert s >= 1
    pad = KH // 2
    Ho, Wo = H * s, W * s

    out_dtype = x.dtype
    if compute_dtype is None:
        compute_dtype = x.dtype

    # ---- constant structure matrices (numpy -> XLA constants) ---------------
    # Width nearest-duplication + horizontal zero halo: xwp = x2d @ dwp.
    dwp_np = np.zeros((W, Wo + 2 * pad), np.float32)
    for t in range(Wo):
        dwp_np[t // s, pad + t] = 1.0

    # M[y, kh, i] = 1 iff conv tap kh at output row y reads (after nearest
    # upsample + vertical zero pad) low-res row i.
    M = np.zeros((Ho, KH, H), np.float32)
    for y in range(Ho):
        for kh in range(KH):
            r = y + kh - pad
            if 0 <= r < Ho:
                M[y, kh, r // s] = 1.0

    # ---- fold weights (amortized over batch; analogous to v1's w2 packing):
    # A[kw, co*Ho + y, ci*H + i] = sum_kh M[y,kh,i] * W[co,ci,kh,kw]
    A = jnp.einsum('yhi,ochw->woyci', jnp.asarray(M), weight.astype(jnp.float32))
    A = A.reshape(KW, Cout * Ho, Cin * H).astype(compute_dtype)

    # Free reshape -- no wrapper pass over any upsampled tensor.
    x2d = x.reshape(N, Cin * H, W).astype(compute_dtype)
    dwp = jnp.asarray(dwp_np, compute_dtype)

    kernel = functools.partial(_upsample_conv_kernel, KW=KW, Wo=Wo,
                               negative_slope=negative_slope,
                               activation=activation)

    # VMEM budget derived from actual block sizes (scale-safe on v7x's 64 MiB).
    vmem_bytes = (
        _padded_block_bytes((1, Cin * H, W), compute_dtype)
        + _padded_block_bytes((W, Wo + 2 * pad), compute_dtype)
        + _padded_block_bytes((KW, Cout * Ho, Cin * H), compute_dtype)
        + _padded_block_bytes((1, Cout * Ho, Wo), out_dtype)
        + (8 << 20))                       # margin for spills / internal scratch
    vmem_bytes = int(min(vmem_bytes, 100 << 20))

    out2d = pl.pallas_call(
        kernel,
        out_shape=jax.ShapeDtypeStruct((N, Cout * Ho, Wo), out_dtype),
        grid=(N,),
        in_specs=[
            pl.BlockSpec((1, Cin * H, W), lambda n: (n, 0, 0)),
            pl.BlockSpec((W, Wo + 2 * pad), lambda n: (0, 0)),
            pl.BlockSpec((KW, Cout * Ho, Cin * H), lambda n: (0, 0, 0)),
        ],
        out_specs=pl.BlockSpec((1, Cout * Ho, Wo), lambda n: (n, 0, 0)),
        compiler_params=pltpu.CompilerParams(
            # one batch element per TensorCore on v7x; cheap serial loop on v5e/v6e
            dimension_semantics=("parallel",),
            vmem_limit_bytes=vmem_bytes),
    )(x2d, dwp, A)

    # Rows are already (co, y)-ordered -> free reshape back to NCHW.
    return out2d.reshape(N, Cout, Ho, Wo)


def _reference(x, weight, *, upscale_factor=2, negative_slope=0.2,
               activation=True):
    """Pure-JAX reference (XLA conv) for correctness checking."""
    pad = weight.shape[2] // 2
    x_up = jnp.repeat(jnp.repeat(x, upscale_factor, axis=2),
                      upscale_factor, axis=3)
    y = jax.lax.conv_general_dilated(
        x_up, weight, window_strides=(1, 1),
        padding=[(pad, pad), (pad, pad)],
        dimension_numbers=("NCHW", "OIHW", "NCHW"))
    if activation:
        y = jnp.where(y >= 0, y, y * negative_slope)
    return y


def _kaiming_uniform_leaky_relu(key, shape, a):
    """torch.nn.init.kaiming_uniform_(w, a=a, nonlinearity='leaky_relu')."""
    cout, cin, kh, kw = shape
    fan_in = cin * kh * kw
    gain = math.sqrt(2.0 / (1.0 + a * a))
    bound = gain * math.sqrt(3.0 / fan_in)
    return jax.random.uniform(key, shape, jnp.float32, -bound, bound)


if __name__ == "__main__":
    in_channels, out_channels = 4, 8
    kernel_size, upscale_factor, negative_slope = 5, 2, 0.2

    key = jax.random.PRNGKey(0)
    kx, kw = jax.random.split(key)

    x = jax.random.normal(kx, (2, in_channels, 16, 16), jnp.float32)
    weight = _kaiming_uniform_leaky_relu(
        kw, (out_channels, in_channels, kernel_size, kernel_size),
        a=negative_slope)

    out = upsample_interpolate_conv2d(
        x, weight, upscale_factor=upscale_factor,
        negative_slope=negative_slope, activation=True)
    out = jax.block_until_ready(out)

    ref = _reference(x, weight, upscale_factor=upscale_factor,
                     negative_slope=negative_slope, activation=True)
    assert out.shape == (2, out_channels, 32, 32), out.shape
    assert jnp.allclose(out, ref, atol=1e-3, rtol=1e-3), (
        float(jnp.max(jnp.abs(out - ref))))

    print("KERNEL_OK")
</pallas_src>

<mosaic_0001>
module attributes {stable_mosaic.version = 11 : i64} {
  func.func @_upsample_conv_kernel(%arg0: i32, %arg1: memref<1x64x16xf32, #tpu.memory_space<vmem>>, %arg2: memref<16x36xf32, #tpu.memory_space<vmem>>, %arg3: memref<5x256x64xf32, #tpu.memory_space<vmem>>, %arg4: memref<1x256x32xf32, #tpu.memory_space<vmem>>) attributes {dimension_semantics = [#tpu.dimension_semantics<parallel>], iteration_bounds = array<i64: 2>, scalar_prefetch = 0 : i64, scratch_operands = 0 : i64, tpu.core_type = #tpu.core_type<tc>, window_params = [{transform_indices = @transform_0, window_bounds = array<i64: 1, 64, 16>}, {pipeline_mode = #tpu.pipeline_mode<synchronous>, transform_indices = @transform_1, window_bounds = array<i64: 16, 36>}, {pipeline_mode = #tpu.pipeline_mode<synchronous>, transform_indices = @transform_2, window_bounds = array<i64: 5, 256, 64>}, {transform_indices = @transform_3, window_bounds = array<i64: 1, 256, 32>}]} {
    %c0 = arith.constant 0 : index
    %c0_0 = arith.constant 0 : index
    %c0_1 = arith.constant 0 : index
    %0 = vector.load %arg1[%c0, %c0_0, %c0_1] : memref<1x64x16xf32, #tpu.memory_space<vmem>>, vector<1x64x16xf32>
    %1 = vector.shape_cast %0 : vector<1x64x16xf32> to vector<64x16xf32>
    %c0_2 = arith.constant 0 : index
    %c0_3 = arith.constant 0 : index
    %2 = vector.load %arg2[%c0_2, %c0_3] : memref<16x36xf32, #tpu.memory_space<vmem>>, vector<16x36xf32>
    %cst = arith.constant dense<0.000000e+00> : vector<64x36xf32>
    %3 = tpu.matmul %1, %2, %cst {dimension_numbers = #tpu.dot_dimension_numbers<[1], [0], [0], [1], [0, 0, 1, 1], [], []>} : vector<64x16xf32>, vector<16x36xf32>, vector<64x36xf32> -> vector<64x36xf32>
    %4 = vector.extract_strided_slice %3 {offsets = [0, 0], sizes = [64, 32], strides = [1, 1]} : vector<64x36xf32> to vector<64x32xf32>
    %c0_4 = arith.constant 0 : index
    %c0_5 = arith.constant 0 : index
    %c0_6 = arith.constant 0 : index
    %5 = vector.load %arg3[%c0_4, %c0_5, %c0_6] : memref<5x256x64xf32, #tpu.memory_space<vmem>>, vector<1x256x64xf32>
    %6 = vector.shape_cast %5 : vector<1x256x64xf32> to vector<256x64xf32>
    %cst_7 = arith.constant dense<0.000000e+00> : vector<256x32xf32>
    %7 = tpu.matmul %6, %4, %cst_7 {dimension_numbers = #tpu.dot_dimension_numbers<[1], [0], [0], [1], [0, 0, 1, 1], [], []>} : vector<256x64xf32>, vector<64x32xf32>, vector<256x32xf32> -> vector<256x32xf32>
    %8 = vector.extract_strided_slice %3 {offsets = [0, 1], sizes = [64, 32], strides = [1, 1]} : vector<64x36xf32> to vector<64x32xf32>
    %c1 = arith.constant 1 : index
    %c0_8 = arith.constant 0 : index
    %c0_9 = arith.constant 0 : index
    %9 = vector.load %arg3[%c1, %c0_8, %c0_9] : memref<5x256x64xf32, #tpu.memory_space<vmem>>, vector<1x256x64xf32>
    %10 = vector.shape_cast %9 : vector<1x256x64xf32> to vector<256x64xf32>
    %cst_10 = arith.constant dense<0.000000e+00> : vector<256x32xf32>
    %11 = tpu.matmul %10, %8, %cst_10 {dimension_numbers = #tpu.dot_dimension_numbers<[1], [0], [0], [1], [0, 0, 1, 1], [], []>} : vector<256x64xf32>, vector<64x32xf32>, vector<256x32xf32> -> vector<256x32xf32>
    %12 = arith.addf %7, %11 : vector<256x32xf32>
    %13 = vector.extract_strided_slice %3 {offsets = [0, 2], sizes = [64, 32], strides = [1, 1]} : vector<64x36xf32> to vector<64x32xf32>
    %c2 = arith.constant 2 : index
    %c0_11 = arith.constant 0 : index
    %c0_12 = arith.constant 0 : index
    %14 = vector.load %arg3[%c2, %c0_11, %c0_12] : memref<5x256x64xf32, #tpu.memory_space<vmem>>, vector<1x256x64xf32>
    %15 = vector.shape_cast %14 : vector<1x256x64xf32> to vector<256x64xf32>
    %cst_13 = arith.constant dense<0.000000e+00> : vector<256x32xf32>
    %16 = tpu.matmul %15, %13, %cst_13 {dimension_numbers = #tpu.dot_dimension_numbers<[1], [0], [0], [1], [0, 0, 1, 1], [], []>} : vector<256x64xf32>, vector<64x32xf32>, vector<256x32xf32> -> vector<256x32xf32>
    %17 = arith.addf %12, %16 : vector<256x32xf32>
    %18 = vector.extract_strided_slice %3 {offsets = [0, 3], sizes = [64, 32], strides = [1, 1]} : vector<64x36xf32> to vector<64x32xf32>
    %c3 = arith.constant 3 : index
    %c0_14 = arith.constant 0 : index
    %c0_15 = arith.constant 0 : index
    %19 = vector.load %arg3[%c3, %c0_14, %c0_15] : memref<5x256x64xf32, #tpu.memory_space<vmem>>, vector<1x256x64xf32>
    %20 = vector.shape_cast %19 : vector<1x256x64xf32> to vector<256x64xf32>
    %cst_16 = arith.constant dense<0.000000e+00> : vector<256x32xf32>
    %21 = tpu.matmul %20, %18, %cst_16 {dimension_numbers = #tpu.dot_dimension_numbers<[1], [0], [0], [1], [0, 0, 1, 1], [], []>} : vector<256x64xf32>, vector<64x32xf32>, vector<256x32xf32> -> vector<256x32xf32>
    %22 = arith.addf %17, %21 : vector<256x32xf32>
    %23 = vector.extract_strided_slice %3 {offsets = [0, 4], sizes = [64, 32], strides = [1, 1]} : vector<64x36xf32> to vector<64x32xf32>
    %c4 = arith.constant 4 : index
    %c0_17 = arith.constant 0 : index
    %c0_18 = arith.constant 0 : index
    %24 = vector.load %arg3[%c4, %c0_17, %c0_18] : memref<5x256x64xf32, #tpu.memory_space<vmem>>, vector<1x256x64xf32>
    %25 = vector.shape_cast %24 : vector<1x256x64xf32> to vector<256x64xf32>
    %cst_19 = arith.constant dense<0.000000e+00> : vector<256x32xf32>
    %26 = tpu.matmul %25, %23, %cst_19 {dimension_numbers = #tpu.dot_dimension_numbers<[1], [0], [0], [1], [0, 0, 1, 1], [], []>} : vector<256x64xf32>, vector<64x32xf32>, vector<256x32xf32> -> vector<256x32xf32>
    %27 = arith.addf %22, %26 : vector<256x32xf32>
    %cst_20 = arith.constant 0.000000e+00 : f32
    %28 = vector.broadcast %cst_20 : f32 to vector<256x32xf32>
    %29 = arith.cmpf oge, %27, %28 : vector<256x32xf32>
    %cst_21 = arith.constant 2.000000e-01 : f32
    %30 = vector.broadcast %cst_21 : f32 to vector<256x32xf32>
    %31 = arith.mulf %27, %30 : vector<256x32xf32>
    %32 = arith.select %29, %27, %31 : vector<256x32xi1>, vector<256x32xf32>
    %c0_22 = arith.constant 0 : index
    %c0_23 = arith.constant 0 : index
    %c0_24 = arith.constant 0 : index
    %33 = vector.load %arg4[%c0_22, %c0_23, %c0_24] : memref<1x256x32xf32, #tpu.memory_space<vmem>>, vector<1x256x32xf32>
    %34 = vector.shape_cast %33 : vector<1x256x32xf32> to vector<256x32xf32>
    %35 = vector.shape_cast %32 : vector<256x32xf32> to vector<1x256x32xf32>
    tpu.vector_store %arg4[%c0_22, %c0_23, %c0_24], %35 {strides = array<i32>} : memref<1x256x32xf32, #tpu.memory_space<vmem>>, vector<1x256x32xf32>,
    return
  }
  func.func @transform_0(%arg0: i32) -> (i32, i32, i32) {
    %c0_i32 = arith.constant 0 : i32
    %c0_i32_0 = arith.constant 0 : i32
    %c0_i32_1 = arith.constant 0 : i32
    return %arg0, %c0_i32, %c0_i32_0 : i32, i32, i32
  }
  func.func @transform_1(%arg0: i32) -> (i32, i32) {
    %c0_i32 = arith.constant 0 : i32
    %c0_i32_0 = arith.constant 0 : i32
    %c0_i32_1 = arith.constant 0 : i32
    return %c0_i32, %c0_i32_0 : i32, i32
  }
  func.func @transform_2(%arg0: i32) -> (i32, i32, i32) {
    %c0_i32 = arith.constant 0 : i32
    %c0_i32_0 = arith.constant 0 : i32
    %c0_i32_1 = arith.constant 0 : i32
    %c0_i32_2 = arith.constant 0 : i32
    return %c0_i32, %c0_i32_0, %c0_i32_1 : i32, i32, i32
  }
  func.func @transform_3(%arg0: i32) -> (i32, i32, i32) {
    %c0_i32 = arith.constant 0 : i32
    %c0_i32_0 = arith.constant 0 : i32
    %c0_i32_1 = arith.constant 0 : i32
    return %arg0, %c0_i32, %c0_i32_0 : i32, i32, i32
  }
}

</mosaic_0001>

<llo_original>
// kernel: tpu_custom_call.1
$region0: #{tpu_custom_call.1}
  #allocation0 [shape = 'u32[]', space=smem, size = 0x4, offset = 0x4, fixed_abs, tag = 'smem constant byte address 0x4 - core index']
  #allocation1 [shape = 'u32[144,128]{1,0:T(1,128)}', space=vmem, size = 0x12000, scoped, tag = 'internal scratch']
  %s0 = inlined_call_operand.vmem [shape: f32[2,64,16], index: 0, kind: input, shape index: {}]
  %s1 = inlined_call_operand.vmem [shape: f32[16,36], index: 1, kind: input, shape index: {}]
  %s2 = inlined_call_operand.vmem [shape: f32[5,256,64], index: 2, kind: input, shape index: {}]
  %s3 = inlined_call_operand.vmem [shape: f32[2,256,32], index: 3, kind: output, shape index: {}]
  %s4 = sld [smem:[#allocation0]]
  $region45: #{tpu_custom_call.1} parent=0
    _
  %s6 = ssub.s32 1, %s4
  %s7 = scalar_select 0, %s6, %s4
  loop: start=0, step=1, limit=4
  $region2: #{tpu_custom_call.1} parent=0 // loop_pre_header
    _
  $region3: #{tpu_custom_call.1} parent=0 // loop_header
    %s9 = sphi 0, %s13
    %p10 = scmp.ge.s32.totalorder %s9, 4
    %s19 = sphi 0, %s21
    %s22 = sphi 0, %s19
    %s23 = sphi 0, %s22
    %s39 = sphi 0, %s23
    %s43 = sphi 0, %s43
    %s45 = sphi 0, %s43
    %s46 = sphi 0, %s45
    %s60 = sphi 0, %s46
    %s64 = sphi 0, %s64
    %s66 = sphi 0, %s64
    %s67 = sphi 0, %s66
    %s81 = sphi 0, %s67
    %s87 = sphi 0, %s89
    %s90 = sphi 0, %s87
    %s91 = sphi 0, %s90
    %s107 = sphi 0, %s91
  $region4: #{tpu_custom_call.1} parent=0 // loop_header_branch
    %12 = sbr.rel (%p10) target = $region8
  $region5: #{tpu_custom_call.1} parent=0 // loop_body
    %s14 = ssub.s32 %s9, 1
    %s15 = ssub.s32 %s9, 2
    %s16 = sadd.s32 %s9, 1
    %s17 = ssub.s32 %s9, %s16
    %p18 = scmp.eq.s32.totalorder %s17, 0
    %s20 = sadd.s32 %s19, 1
    %s21 = scalar_select %p18, %s19, %s20
    %p24 = pneg %p18
    %p25 = scmp.eq.s32.totalorder %s9, 1
    %p26 = por %p24, %p25
    %p27 = scmp.ne.s32.totalorder %s19, %s22
    %p28 = scmp.eq.s32.totalorder %s9, 0
    %p29 = por %p27, %p28
    %p30 = scmp.ne.s32.totalorder %s19, %s22
    %p31 = scmp.eq.s32.totalorder %s14, 1
    %p32 = por %p30, %p31
    %p33 = scmp.ne.s32.totalorder %s22, %s23
    %p34 = scmp.eq.s32.totalorder %s14, 0
    %p35 = por %p33, %p34
    %p36 = scmp.ne.s32.totalorder %s22, %s23
    %p37 = scmp.eq.s32.totalorder %s15, 1
    %p38 = por %p36, %p37
    %p40 = scmp.ne.s32.totalorder %s23, %s39
    %p41 = scmp.eq.s32.totalorder %s15, 0
    %p42 = por %p40, %p41
    %s44 = sadd.s32 %s43, 1
    %p47 = scmp.eq.s32.totalorder %s9, 1
    %p48 = scmp.ne.s32.totalorder %s43, %s45
    %p49 = scmp.eq.s32.totalorder %s9, 0
    %p50 = por %p48, %p49
    %p51 = scmp.ne.s32.totalorder %s43, %s45
    %p52 = scmp.eq.s32.totalorder %s14, 1
    %p53 = por %p51, %p52
    %p54 = scmp.ne.s32.totalorder %s45, %s46
    %p55 = scmp.eq.s32.totalorder %s14, 0
    %p56 = por %p54, %p55
    %p57 = scmp.ne.s32.totalorder %s45, %s46
    %p58 = scmp.eq.s32.totalorder %s15, 1
    %p59 = por %p57, %p58
    %p61 = scmp.ne.s32.totalorder %s46, %s60
    %p62 = scmp.eq.s32.totalorder %s15, 0
    %p63 = por %p61, %p62
    %s65 = sadd.s32 %s64, 1
    %p68 = scmp.eq.s32.totalorder %s9, 1
    %p69 = scmp.ne.s32.totalorder %s64, %s66
    %p70 = scmp.eq.s32.totalorder %s9, 0
    %p71 = por %p69, %p70
    %p72 = scmp.ne.s32.totalorder %s64, %s66
    %p73 = scmp.eq.s32.totalorder %s14, 1
    %p74 = por %p72, %p73
    %p75 = scmp.ne.s32.totalorder %s66, %s67
    %p76 = scmp.eq.s32.totalorder %s14, 0
    %p77 = por %p75, %p76
    %p78 = scmp.ne.s32.totalorder %s66, %s67
    %p79 = scmp.eq.s32.totalorder %s15, 1
    %p80 = por %p78, %p79
    %p82 = scmp.ne.s32.totalorder %s67, %s81
    %p83 = scmp.eq.s32.totalorder %s15, 0
    %p84 = por %p82, %p83
    %s85 = ssub.s32 %s9, %s16
    %p86 = scmp.eq.s32.totalorder %s85, 0
    %s88 = sadd.s32 %s87, 1
    %s89 = scalar_select %p86, %s87, %s88
    %p92 = pneg %p86
    %p93 = scmp.eq.s32.totalorder %s9, 1
    %p94 = por %p92, %p93
    %p95 = scmp.ne.s32.totalorder %s87, %s90
    %p96 = scmp.eq.s32.totalorder %s9, 0
    %p97 = por %p95, %p96
    %p98 = scmp.ne.s32.totalorder %s87, %s90
    %p99 = scmp.eq.s32.totalorder %s14, 1
    %p100 = por %p98, %p99
    %p101 = scmp.ne.s32.totalorder %s90, %s91
    %p102 = scmp.eq.s32.totalorder %s14, 0
    %p103 = por %p101, %p102
    %p104 = scmp.ne.s32.totalorder %s90, %s91
    %p105 = scmp.eq.s32.totalorder %s15, 1
    %p106 = por %p104, %p105
    %p108 = scmp.ne.s32.totalorder %s91, %s107
    %p109 = scmp.eq.s32.totalorder %s15, 0
    %p110 = por %p108, %p109
    %p111 = scmp.le.s32.totalorder 1, %s9
    %p112 = scmp.lt.s32.totalorder %s9, 3
    %p113 = pnand %p111, %p112
    %p114 = pneg %p113
    // Predicated region
    $region9: #{tpu_custom_call.1} parent=5 // pred_check
      _
    $region10: #{tpu_custom_call.1} parent=5 // pred_check_branch
      %116 = sbr.rel (%p113) target = $region12
    $region11: #{tpu_custom_call.1} parent=5 // pred_region
      %s117 = ssub.s32 %s9, 1
      // Predicated region
      $region13: #{tpu_custom_call.1} parent=11 // pred_check
        %p118 = pneg %p56
      $region14: #{tpu_custom_call.1} parent=11 // pred_check_branch
        %120 = sbr.rel (%p118) target = $region16
      $region15: #{tpu_custom_call.1} parent=11 // pred_region
        _
      $region16: #{tpu_custom_call.1} parent=11 // pred_fallthru
        _
      // Predicated region
      $region17: #{tpu_custom_call.1} parent=11 // pred_check
        %p121 = pneg %p77
      $region18: #{tpu_custom_call.1} parent=11 // pred_check_branch
        %123 = sbr.rel (%p121) target = $region20
      $region19: #{tpu_custom_call.1} parent=11 // pred_region
        _
      $region20: #{tpu_custom_call.1} parent=11 // pred_fallthru
        _
    $region12: #{tpu_custom_call.1} parent=5 // pred_fallthru
      _
    %p124 = scmp.lt.s32.totalorder %s9, 2
    // Predicated region
    $region21: #{tpu_custom_call.1} parent=5 // pred_check
      %p125 = pneg %p124
    $region22: #{tpu_custom_call.1} parent=5 // pred_check_branch
      %127 = sbr.rel (%p125) target = $region24
    $region23: #{tpu_custom_call.1} parent=5 // pred_region
      // Predicated region
      $region25: #{tpu_custom_call.1} parent=23 // pred_check
        %p128 = pneg %p29
      $region26: #{tpu_custom_call.1} parent=23 // pred_check_branch
        %130 = sbr.rel (%p128) target = $region28
      $region27: #{tpu_custom_call.1} parent=23 // pred_region
        %p131 = scmp.lt.s32.totalorder %s9, 1
        %s132 = scalar_select %p131, %s9, 1
        %s133 = smul.addr %s132, 8
        %s134 = smul.addr %s133, 8
        %s135 = scalar_lea.vmem %s0, %s134
      $region28: #{tpu_custom_call.1} parent=23 // pred_fallthru
        _
    $region24: #{tpu_custom_call.1} parent=5 // pred_fallthru
      _
    %p136 = scmp.le.s32.totalorder 1, %s9
    %p137 = scmp.lt.s32.totalorder %s9, 3
    %p138 = pnand %p136, %p137
    %p139 = pneg %p138
    // Predicated region
    $region29: #{tpu_custom_call.1} parent=5 // pred_check
      _
    $region30: #{tpu_custom_call.1} parent=5 // pred_check_branch
      %141 = sbr.rel (%p138) target = $region32
    $region31: #{tpu_custom_call.1} parent=5 // pred_region
      %s142 = ssub.s32 %s9, 1
      %p143 = scmp.lt.s32.totalorder %s14, 1
      %s144 = scalar_select %p143, %s14, 1
      %s145 = smul.addr %s144, 8
      %s146 = smul.addr %s145, 8
      %s147 = scalar_lea.vmem %s0, %s146
      %p148 = pneg %p35
      %p149 = pneg %p32
      %p150 = pneg %p56
      %p151 = pneg %p53
      %p152 = pneg %p77
      %p153 = pneg %p74
      %p154 = pneg %p103
      %p155 = pneg %p100
      %p156 = scmp.lt.s32.totalorder %s14, 1
      %s157 = scalar_select %p156, %s14, 1
      %s158 = smul.addr %s157, 32
      %s159 = smul.addr %s158, 8
      %s160 = scalar_lea.vmem %s3, %s159
      %p161 = scmp.lt.s32.totalorder %s14, 1
      %s162 = scalar_select %p161, %s14, 1
      %s163 = smul.addr %s162, 8
      %s164 = smul.addr %s163, 8
      %s165 = scalar_lea.vmem %s0, %s164
      %p166 = scmp.lt.s32.totalorder %s14, 1
      %s167 = scalar_select %p166, %s14, 1
      %s168 = smul.addr %s167, 32
      %s169 = smul.addr %s168, 8
      %s170 = scalar_lea.vmem %s3, %s169
      %v171 = vld [vmem:[%s165] sm:$0xff]
      %v172 = vld [vmem:[%s165 + $0x8] sm:$0xff]
      %v173 = vld [vmem:[%s165 + $0x10] sm:$0xff]
      %v174 = vld [vmem:[%s165 + $0x18] sm:$0xff]
      %v175 = vld [vmem:[%s165 + $0x20] sm:$0xff]
      %v176 = vld [vmem:[%s165 + $0x28] sm:$0xff]
      %v177 = vld [vmem:[%s165 + $0x30] sm:$0xff]
      %v178 = vld [vmem:[%s165 + $0x38] sm:$0xff]
      %v179 = vld [vmem:[%s1] sm:$0xff]
      %v180 = vld [vmem:[%s1 + $0x8] sm:$0xff]
      %vm181 = vcmask 130048
      %v183 = vsel %vm181, %v171, 0
      %v186 = vsel %vm181, %v172, 0
      %v189 = vsel %vm181, %v173, 0
      %v192 = vsel %vm181, %v174, 0
      %v195 = vsel %vm181, %v175, 0
      %v198 = vsel %vm181, %v176, 0
      %v201 = vsel %vm181, %v177, 0
      %v204 = vsel %vm181, %v178, 0
      %206 = vmatprep.subr.mxu0 0.0
      %207 = vmatpush1.msra.mxu0 %v179
      %208 = vmatprep.subr.mxu0 0.0
      %209 = vmatpush1.msra.mxu0 %v180
      %210 = vmatprep.subr.mxu0 0.0
      %211 = vmatpush1.msra.mxu0 0.0
      %212 = vmatprep.subr.mxu0 0.0
      %213 = vmatpush1.msra.mxu0 0.0
      %214 = vmatprep.subr.mxu0 0.0
      %215 = vmatpush1.msra.mxu0 0.0
      %216 = vmatprep.subr.mxu0 0.0
      %217 = vmatpush1.msra.mxu0 0.0
      %218 = vmatprep.subr.mxu0 0.0
      %219 = vmatpush1.msra.mxu0 0.0
      %220 = vmatprep.subr.mxu0 0.0
      %221 = vmatpush1.msra.mxu0 0.0
      %222 = vmatprep.subr.mxu0 0.0
      %223 = vmatpush1.msra.mxu0 0.0
      %224 = vmatprep.subr.mxu0 0.0
      %225 = vmatpush1.msra.mxu0 0.0
      %226 = vmatprep.subr.mxu0 0.0
      %227 = vmatpush1.msra.mxu0 0.0
      %228 = vmatprep.subr.mxu0 0.0
      %229 = vmatpush1.msra.mxu0 0.0
      %230 = vmatprep.subr.mxu0 0.0
      %231 = vmatpush1.msra.mxu0 0.0
      %232 = vmatprep.subr.mxu0 0.0
      %233 = vmatpush1.msra.mxu0 0.0
      %234 = vmatprep.subr.mxu0 0.0
      %235 = vmatpush1.msra.mxu0 0.0
      %236 = vmatprep.subr.mxu0 0.0
      %237 = vmatpush1.msra.mxu0 0.0
      %238 = vmatprep.subr.mxu0 0.0
      %239 = vmatpush1.msra.mxu0 0.0
      %240 = vmatprep.subr.mxu0 0.0
      %241 = vmatpush1.msra.mxu0 0.0
      %242 = vmatprep.subr.mxu0 0.0
      %243 = vmatpush1.msra.mxu0 0.0
      %244 = vmatprep.subr.mxu0 0.0
      %245 = vmatpush1.msra.mxu0 0.0
      %246 = vmatprep.subr.mxu0 0.0
      %247 = vmatpush1.msra.mxu0 0.0
      %248 = vmatprep.subr.mxu0 0.0
      %249 = vmatpush1.msra.mxu0 0.0
      %250 = vmatprep.subr.mxu0 0.0
      %251 = vmatpush1.msra.mxu0 0.0
      %252 = vmatprep.subr.mxu0 0.0
      %253 = vmatpush1.msra.mxu0 0.0
      %254 = vmatprep.subr.mxu0 0.0
      %255 = vmatpush1.msra.mxu0 0.0
      %256 = vmatprep.subr.mxu0 0.0
      %257 = vmatpush1.msra.mxu0 0.0
      %258 = vmatprep.subr.mxu0 0.0
      %259 = vmatpush1.msra.mxu0 0.0
      %260 = vmatprep.subr.mxu0 0.0
      %261 = vmatpush1.msra.mxu0 0.0
      %262 = vmatprep.subr.mxu0 0.0
      %263 = vmatpush1.msra.mxu0 0.0
      %264 = vmatprep.subr.mxu0 0.0
      %265 = vmatpush1.msra.mxu0 0.0
      %266 = vmatprep.subr.mxu0 0.0
      %267 = vmatpush1.msra.mxu0 0.0
      %268 = vmatprep.subr.mxu0 0.0
      %269 = vmatpush1.msra.mxu0 0.0
      %270 = vmatprep.mubr.f32.mxu0 0.0
      %271 = vmatmul.mubr.f32.gmra.mrb[0].mxu0 %v183
      %v272 = vpop.f32.mrb[0].mxu0
      %v273 = vadd.f32 0.0, %v272
      %v274 = vpop.f32.mrb[0].mxu0
      %275 = vmatprep.mubr.f32.mxu0 0.0
      %276 = vmatmul.mubr.f32.gmra.mrb[0].mxu0 %v186
      %v277 = vpop.f32.mrb[0].mxu0
      %v278 = vadd.f32 0.0, %v277
      %v279 = vpop.f32.mrb[0].mxu0
      %280 = vmatprep.mubr.f32.mxu0 0.0
      %281 = vmatmul.mubr.f32.gmra.mrb[0].mxu0 %v189
      %v282 = vpop.f32.mrb[0].mxu0
      %v283 = vadd.f32 0.0, %v282
      %v284 = vpop.f32.mrb[0].mxu0
      %285 = vmatprep.mubr.f32.mxu0 0.0
      %286 = vmatmul.mubr.f32.gmra.mrb[0].mxu0 %v192
      %v287 = vpop.f32.mrb[0].mxu0
      %v288 = vadd.f32 0.0, %v287
      %v289 = vpop.f32.mrb[0].mxu0
      %290 = vmatprep.mubr.f32.mxu0 0.0
      %291 = vmatmul.mubr.f32.gmra.mrb[0].mxu0 %v195
      %v292 = vpop.f32.mrb[0].mxu0
      %v293 = vadd.f32 0.0, %v292
      %v294 = vpop.f32.mrb[0].mxu0
      %295 = vmatprep.mubr.f32.mxu0 0.0
      %296 = vmatmul.mubr.f32.gmra.mrb[0].mxu0 %v198
      %v297 = vpop.f32.mrb[0].mxu0
      %v298 = vadd.f32 0.0, %v297
      %v299 = vpop.f32.mrb[0].mxu0
      %300 = vmatprep.mubr.f32.mxu0 0.0
      %301 = vmatmul.mubr.f32.gmra.mrb[0].mxu0 %v201
      %v302 = vpop.f32.mrb[0].mxu0
      %v303 = vadd.f32 0.0, %v302
      %v304 = vpop.f32.mrb[0].mxu0
      %305 = vmatprep.mubr.f32.mxu0 0.0
      %306 = vmatmul.mubr.f32.gmra.mrb[0].mxu0 %v204
      %v307 = vpop.f32.mrb[0].mxu0
      %v308 = vadd.f32 0.0, %v307
      %v309 = vpop.f32.mrb[0].mxu0
      %310 = vdwg.mxu0
      %v311 = vld [vmem:[%s2] sm:$0xff]
      %v312 = vld [vmem:[%s2 + $0x8] sm:$0xff]
      %v313 = vld [vmem:[%s2 + $0x10] sm:$0xff]
      %v314 = vld [vmem:[%s2 + $0x18] sm:$0xff]
      %v315 = vld [vmem:[%s2 + $0x20] sm:$0xff]
      %v316 = vld [vmem:[%s2 + $0x28] sm:$0xff]
      %v317 = vld [vmem:[%s2 + $0x30] sm:$0xff]
      %v318 = vld [vmem:[%s2 + $0x38] sm:$0xff]
      %v319 = vld [vmem:[%s2 + $0x40] sm:$0xff]
      %v320 = vld [vmem:[%s2 + $0x48] sm:$0xff]
      %v321 = vld [vmem:[%s2 + $0x50] sm:$0xff]
      %v322 = vld [vmem:[%s2 + $0x58] sm:$0xff]
      %v323 = vld [vmem:[%s2 + $0x60] sm:$0xff]
      %v324 = vld [vmem:[%s2 + $0x68] sm:$0xff]
      %v325 = vld [vmem:[%s2 + $0x70] sm:$0xff]
      %v326 = vld [vmem:[%s2 + $0x78] sm:$0xff]
      %v327 = vld [vmem:[%s2 + $0x80] sm:$0xff]
      %v328 = vld [vmem:[%s2 + $0x88] sm:$0xff]
      %v329 = vld [vmem:[%s2 + $0x90] sm:$0xff]
      %v330 = vld [vmem:[%s2 + $0x98] sm:$0xff]
      %v331 = vld [vmem:[%s2 + $0xa0] sm:$0xff]
      %v332 = vld [vmem:[%s2 + $0xa8] sm:$0xff]
      %v333 = vld [vmem:[%s2 + $0xb0] sm:$0xff]
      %v334 = vld [vmem:[%s2 + $0xb8] sm:$0xff]
      %v335 = vld [vmem:[%s2 + $0xc0] sm:$0xff]
      %v336 = vld [vmem:[%s2 + $0xc8] sm:$0xff]
      %v337 = vld [vmem:[%s2 + $0xd0] sm:$0xff]
      %v338 = vld [vmem:[%s2 + $0xd8] sm:$0xff]
      %v339 = vld [vmem:[%s2 + $0xe0] sm:$0xff]
      %v340 = vld [vmem:[%s2 + $0xe8] sm:$0xff]
      %v341 = vld [vmem:[%s2 + $0xf0] sm:$0xff]
      %v342 = vld [vmem:[%s2 + $0xf8] sm:$0xff]
      %s343 = scalar_lea.vmem %s2, 256
      %v344 = vld [vmem:[%s343] sm:$0xff]
      %v345 = vld [vmem:[%s343 + $0x8] sm:$0xff]
      %v346 = vld [vmem:[%s343 + $0x10] sm:$0xff]
      %v347 = vld [vmem:[%s343 + $0x18] sm:$0xff]
      %v348 = vld [vmem:[%s343 + $0x20] sm:$0xff]
      %v349 = vld [vmem:[%s343 + $0x28] sm:$0xff]
      %v350 = vld [vmem:[%s343 + $0x30] sm:$0xff]
      %v351 = vld [vmem:[%s343 + $0x38] sm:$0xff]
      %v352 = vld [vmem:[%s343 + $0x40] sm:$0xff]
      %v353 = vld [vmem:[%s343 + $0x48] sm:$0xff]
      %v354 = vld [vmem:[%s343 + $0x50] sm:$0xff]
      %v355 = vld [vmem:[%s343 + $0x58] sm:$0xff]
      %v356 = vld [vmem:[%s343 + $0x60] sm:$0xff]
      %v357 = vld [vmem:[%s343 + $0x68] sm:$0xff]
      %v358 = vld [vmem:[%s343 + $0x70] sm:$0xff]
      %v359 = vld [vmem:[%s343 + $0x78] sm:$0xff]
      %v360 = vld [vmem:[%s343 + $0x80] sm:$0xff]
      %v361 = vld [vmem:[%s343 + $0x88] sm:$0xff]
      %v362 = vld [vmem:[%s343 + $0x90] sm:$0xff]
      %v363 = vld [vmem:[%s343 + $0x98] sm:$0xff]
      %v364 = vld [vmem:[%s343 + $0xa0] sm:$0xff]
      %v365 = vld [vmem:[%s343 + $0xa8] sm:$0xff]
      %v366 = vld [vmem:[%s343 + $0xb0] sm:$0xff]
      %v367 = vld [vmem:[%s343 + $0xb8] sm:$0xff]
      %v368 = vld [vmem:[%s343 + $0xc0] sm:$0xff]
      %v369 = vld [vmem:[%s343 + $0xc8] sm:$0xff]
      %v370 = vld [vmem:[%s343 + $0xd0] sm:$0xff]
      %v371 = vld [vmem:[%s343 + $0xd8] sm:$0xff]
      %v372 = vld [vmem:[%s343 + $0xe0] sm:$0xff]
      %v373 = vld [vmem:[%s343 + $0xe8] sm:$0xff]
      %v374 = vld [vmem:[%s343 + $0xf0] sm:$0xff]
      %v375 = vld [vmem:[%s343 + $0xf8] sm:$0xff]
      %384 = vrot.lane.b32.xlu0 %v273, 127
      %v385 = vpop.permute.xlu0 %384
      %386 = vrot.lane.b32.xlu0 %v278, 127
      %v387 = vpop.permute.xlu0 %386
      %388 = vrot.lane.b32.xlu0 %v283, 127
      %v389 = vpop.permute.xlu0 %388
      %390 = vrot.lane.b32.xlu0 %v288, 127
      %v391 = vpop.permute.xlu0 %390
      %392 = vrot.lane.b32.xlu0 %v293, 127
      %v393 = vpop.permute.xlu0 %392
      %394 = vrot.lane.b32.xlu0 %v298, 127
      %v395 = vpop.permute.xlu0 %394
      %396 = vrot.lane.b32.xlu0 %v303, 127
      %v397 = vpop.permute.xlu0 %396
      %398 = vrot.lane.b32.xlu0 %v308, 127
      %v399 = vpop.permute.xlu0 %398
      %vm408 = vcmask 523264
      %v410 = vsel %vm408, %v344, 0
      %v413 = vsel %vm408, %v345, 0
      %v416 = vsel %vm408, %v346, 0
      %v419 = vsel %vm408, %v347, 0
      %v422 = vsel %vm408, %v348, 0
      %v425 = vsel %vm408, %v349, 0
      %v428 = vsel %vm408, %v350, 0
      %v431 = vsel %vm408, %v351, 0
      %v434 = vsel %vm408, %v352, 0
      %v437 = vsel %vm408, %v353, 0
      %v440 = vsel %vm408, %v354, 0
      %v443 = vsel %vm408, %v355, 0
      %v446 = vsel %vm408, %v356, 0
      %v449 = vsel %vm408, %v357, 0
      %v452 = vsel %vm408, %v358, 0
      %v455 = vsel %vm408, %v359, 0
      %v458 = vsel %vm408, %v360, 0
      %v461 = vsel %vm408, %v361, 0
      %v464 = vsel %vm408, %v362, 0
      %v467 = vsel %vm408, %v363, 0
      %v470 = vsel %vm408, %v364, 0
      %v473 = vsel %vm408, %v365, 0
      %v476 = vsel %vm408, %v366, 0
      %v479 = vsel %vm408, %v367, 0
      %v482 = vsel %vm408, %v368, 0
      %v485 = vsel %vm408, %v369, 0
      %v488 = vsel %vm408, %v370, 0
      %v491 = vsel %vm408, %v371, 0
      %v494 = vsel %vm408, %v372, 0
      %v497 = vsel %vm408, %v373, 0
      %v500 = vsel %vm408, %v374, 0
      %v503 = vsel %vm408, %v375, 0
      %505 = vmatprep.subr.mxu0 0.0
      %506 = vmatpush1.msra.mxu0 %v385
      %507 = vmatprep.subr.mxu0 0.0
      %508 = vmatpush1.msra.mxu0 %v387
      %509 = vmatprep.subr.mxu0 0.0
      %510 = vmatpush1.msra.mxu0 %v389
      %511 = vmatprep.subr.mxu0 0.0
      %512 = vmatpush1.msra.mxu0 %v391
      %513 = vmatprep.subr.mxu0 0.0
      %514 = vmatpush1.msra.mxu0 %v393
      %515 = vmatprep.subr.mxu0 0.0
      %516 = vmatpush1.msra.mxu0 %v395
      %517 = vmatprep.subr.mxu0 0.0
      %518 = vmatpush1.msra.mxu0 %v397
      %519 = vmatprep.subr.mxu0 0.0
      %520 = vmatpush1.msra.mxu0 %v399
      %521 = vmatprep.subr.mxu0 0.0
      %522 = vmatpush1.msra.mxu0 0.0
      %523 = vmatprep.subr.mxu0 0.0
      %524 = vmatpush1.msra.mxu0 0.0
      %525 = vmatprep.subr.mxu0 0.0
      %526 = vmatpush1.msra.mxu0 0.0
      %527 = vmatprep.subr.mxu0 0.0
      %528 = vmatpush1.msra.mxu0 0.0
      %529 = vmatprep.subr.mxu0 0.0
      %530 = vmatpush1.msra.mxu0 0.0
      %531 = vmatprep.subr.mxu0 0.0
      %532 = vmatpush1.msra.mxu0 0.0
      %533 = vmatprep.subr.mxu0 0.0
      %534 = vmatpush1.msra.mxu0 0.0
      %535 = vmatprep.subr.mxu0 0.0
      %536 = vmatpush1.msra.mxu0 0.0
      %537 = vmatprep.subr.mxu0 0.0
      %538 = vmatpush1.msra.mxu0 0.0
      %539 = vmatprep.subr.mxu0 0.0
      %540 = vmatpush1.msra.mxu0 0.0
      %541 = vmatprep.subr.mxu0 0.0
      %542 = vmatpush1.msra.mxu0 0.0
      %543 = vmatprep.subr.mxu0 0.0
      %544 = vmatpush1.msra.mxu0 0.0
      %545 = vmatprep.subr.mxu0 0.0
      %546 = vmatpush1.msra.mxu0 0.0
      %547 = vmatprep.subr.mxu0 0.0
      %548 = vmatpush1.msra.mxu0 0.0
      %549 = vmatprep.subr.mxu0 0.0
      %550 = vmatpush1.msra.mxu0 0.0
      %551 = vmatprep.subr.mxu0 0.0
      %552 = vmatpush1.msra.mxu0 0.0
      %553 = vmatprep.subr.mxu0 0.0
      %554 = vmatpush1.msra.mxu0 0.0
      %555 = vmatprep.subr.mxu0 0.0
      %556 = vmatpush1.msra.mxu0 0.0
      %557 = vmatprep.subr.mxu0 0.0
      %558 = vmatpush1.msra.mxu0 0.0
      %559 = vmatprep.subr.mxu0 0.0
      %560 = vmatpush1.msra.mxu0 0.0
      %561 = vmatprep.subr.mxu0 0.0
      %562 = vmatpush1.msra.mxu0 0.0
      %563 = vmatprep.subr.mxu0 0.0
      %564 = vmatpush1.msra.mxu0 0.0
      %565 = vmatprep.subr.mxu0 0.0
      %566 = vmatpush1.msra.mxu0 0.0
      %567 = vmatprep.subr.mxu0 0.0
      %568 = vmatpush1.msra.mxu0 0.0
      %569 = vmatprep.mubr.f32.mxu0 0.0
      %570 = vmatmul.mubr.f32.gmra.mrb[0].mxu0 %v410
      %v571 = vpop.f32.mrb[0].mxu0
      %v572 = vadd.f32 0.0, %v571
      %v573 = vpop.f32.mrb[0].mxu0
      %574 = vmatprep.mubr.f32.mxu0 0.0
      %575 = vmatmul.mubr.f32.gmra.mrb[0].mxu0 %v413
      %v576 = vpop.f32.mrb[0].mxu0
      %v577 = vadd.f32 0.0, %v576
      %v578 = vpop.f32.mrb[0].mxu0
      %579 = vmatprep.mubr.f32.mxu0 0.0
      %580 = vmatmul.mubr.f32.gmra.mrb[0].mxu0 %v416
      %v581 = vpop.f32.mrb[0].mxu0
      %v582 = vadd.f32 0.0, %v581
      %v583 = vpop.f32.mrb[0].mxu0
      %584 = vmatprep.mubr.f32.mxu0 0.0
      %585 = vmatmul.mubr.f32.gmra.mrb[0].mxu0 %v419
      %v586 = vpop.f32.mrb[0].mxu0
      %v587 = vadd.f32 0.0, %v586
      %v588 = vpop.f32.mrb[0].mxu0
      %589 = vmatprep.mubr.f32.mxu0 0.0
      %590 = vmatmul.mubr.f32.gmra.mrb[0].mxu0 %v422
      %v591 = vpop.f32.mrb[0].mxu0
      %v592 = vadd.f32 0.0, %v591
      %v593 = vpop.f32.mrb[0].mxu0
      %594 = vmatprep.mubr.f32.mxu0 0.0
      %595 = vmatmul.mubr.f32.gmra.mrb[0].mxu0 %v425
      %v596 = vpop.f32.mrb[0].mxu0
      %v597 = vadd.f32 0.0, %v596
      %v598 = vpop.f32.mrb[0].mxu0
      %599 = vmatprep.mubr.f32.mxu0 0.0
      %600 = vmatmul.mubr.f32.gmra.mrb[0].mxu0 %v428
      %v601 = vpop.f32.mrb[0].mxu0
      %v602 = vadd.f32 0.0, %v601
      %v603 = vpop.f32.mrb[0].mxu0
      %604 = vmatprep.mubr.f32.mxu0 0.0
      %605 = vmatmul.mubr.f32.gmra.mrb[0].mxu0 %v431
      %v606 = vpop.f32.mrb[0].mxu0
      %v607 = vadd.f32 0.0, %v606
      %v608 = vpop.f32.mrb[0].mxu0
      %609 = vmatprep.mubr.f32.mxu0 0.0
      %610 = vmatmul.mubr.f32.gmra.mrb[0].mxu0 %v434
      %v611 = vpop.f32.mrb[0].mxu0
      %v612 = vadd.f32 0.0, %v611
      %v613 = vpop.f32.mrb[0].mxu0
      %614 = vmatprep.mubr.f32.mxu0 0.0
      %615 = vmatmul.mubr.f32.gmra.mrb[0].mxu0 %v437
      %v616 = vpop.f32.mrb[0].mxu0
      %v617 = vadd.f32 0.0, %v616
      %v618 = vpop.f32.mrb[0].mxu0
      %619 = vmatprep.mubr.f32.mxu0 0.0
      %620 = vmatmul.mubr.f32.gmra.mrb[0].mxu0 %v440
      %v621 = vpop.f32.mrb[0].mxu0
      %v622 = vadd.f32 0.0, %v621
      %v623 = vpop.f32.mrb[0].mxu0
      %624 = vmatprep.mubr.f32.mxu0 0.0
      %625 = vmatmul.mubr.f32.gmra.mrb[0].mxu0 %v443
      %v626 = vpop.f32.mrb[0].mxu0
      %v627 = vadd.f32 0.0, %v626
      %v628 = vpop.f32.mrb[0].mxu0
      %629 = vmatprep.mubr.f32.mxu0 0.0
      %630 = vmatmul.mubr.f32.gmra.mrb[0].mxu0 %v446
      %v631 = vpop.f32.mrb[0].mxu0
      %v632 = vadd.f32 0.0, %v631
      %v633 = vpop.f32.mrb[0].mxu0
      %634 = vmatprep.mubr.f32.mxu0 0.0
      %635 = vmatmul.mubr.f32.gmra.mrb[0].mxu0 %v449
      %v636 = vpop.f32.mrb[0].mxu0
      %v637 = vadd.f32 0.0, %v636
      %v638 = vpop.f32.mrb[0].mxu0
      %639 = vmatprep.mubr.f32.mxu0 0.0
      %640 = vmatmul.mubr.f32.gmra.mrb[0].mxu0 %v452
      %v641 = vpop.f32.mrb[0].mxu0
      %v642 = vadd.f32 0.0, %v641
      %v643 = vpop.f32.mrb[0].mxu0
      %644 = vmatprep.mubr.f32.mxu0 0.0
      %645 = vmatmul.mubr.f32.gmra.mrb[0].mxu0 %v455
      %v646 = vpop.f32.mrb[0].mxu0
      %v647 = vadd.f32 0.0, %v646
      %v648 = vpop.f32.mrb[0].mxu0
      %649 = vmatprep.mubr.f32.mxu0 0.0
      %650 = vmatmul.mubr.f32.gmra.mrb[0].mxu0 %v458
      %v651 = vpop.f32.mrb[0].mxu0
      %v652 = vadd.f32 0.0, %v651
      %v653 = vpop.f32.mrb[0].mxu0
      %654 = vmatprep.mubr.f32.mxu0 0.0
      %655 = vmatmul.mubr.f32.gmra.mrb[0].mxu0 %v461
      %v656 = vpop.f32.mrb[0].mxu0
      %v657 = vadd.f32 0.0, %v656
      %v658 = vpop.f32.mrb[0].mxu0
      %659 = vmatprep.mubr.f32.mxu0 0.0
      %660 = vmatmul.mubr.f32.gmra.mrb[0].mxu0 %v464
      %v661 = vpop.f32.mrb[0].mxu0
      %v662 = vadd.f32 0.0, %v661
      %v663 = vpop.f32.mrb[0].mxu0
      %664 = vmatprep.mubr.f32.mxu0 0.0
      %665 = vmatmul.mubr.f32.gmra.mrb[0].mxu0 %v467
      %v666 = vpop.f32.mrb[0].mxu0
      %v667 = vadd.f32 0.0, %v666
      %v668 = vpop.f32.mrb[0].mxu0
      %669 = vmatprep.mubr.f32.mxu0 0.0
      %670 = vmatmul.mubr.f32.gmra.mrb[0].mxu0 %v470
      %v671 = vpop.f32.mrb[0].mxu0
      %v672 = vadd.f32 0.0, %v671
      %v673 = vpop.f32.mrb[0].mxu0
      %674 = vmatprep.mubr.f32.mxu0 0.0
      %675 = vmatmul.mubr.f32.gmra.mrb[0].mxu0 %v473
      %v676 = vpop.f32.mrb[0].mxu0
      %v677 = vadd.f32 0.0, %v676
      %v678 = vpop.f32.mrb[0].mxu0
      %679 = vmatprep.mubr.f32.mxu0 0.0
      %680 = vmatmul.mubr.f32.gmra.mrb[0].mxu0 %v476
      %v681 = vpop.f32.mrb[0].mxu0
      %v682 = vadd.f32 0.0, %v681
      %v683 = vpop.f32.mrb[0].mxu0
      %684 = vmatprep.mubr.f32.mxu0 0.0
      %685 = vmatmul.mubr.f32.gmra.mrb[0].mxu0 %v479
      %v686 = vpop.f32.mrb[0].mxu0
      %v687 = vadd.f32 0.0, %v686
      %v688 = vpop.f32.mrb[0].mxu0
      %689 = vmatprep.mubr.f32.mxu0 0.0
      %690 = vmatmul.mubr.f32.gmra.mrb[0].mxu0 %v482
      %v691 = vpop.f32.mrb[0].mxu0
      %v692 = vadd.f32 0.0, %v691
      %v693 = vpop.f32.mrb[0].mxu0
      %694 = vmatprep.mubr.f32.mxu0 0.0
      %695 = vmatmul.mubr.f32.gmra.mrb[0].mxu0 %v485
      %v696 = vpop.f32.mrb[0].mxu0
      %v697 = vadd.f32 0.0, %v696
      %v698 = vpop.f32.mrb[0].mxu0
      %699 = vmatprep.mubr.f32.mxu0 0.0
      %700 = vmatmul.mubr.f32.gmra.mrb[0].mxu0 %v488
      %v701 = vpop.f32.mrb[0].mxu0
      %v702 = vadd.f32 0.0, %v701
      %v703 = vpop.f32.mrb[0].mxu0
      %704 = vmatprep.mubr.f32.mxu0 0.0
      %705 = vmatmul.mubr.f32.gmra.mrb[0].mxu0 %v491
      %v706 = vpop.f32.mrb[0].mxu0
      %v707 = vadd.f32 0.0, %v706
      %v708 = vpop.f32.mrb[0].mxu0
      %709 = vmatprep.mubr.f32.mxu0 0.0
      %710 = vmatmul.mubr.f32.gmra.mrb[0].mxu0 %v494
      %v711 = vpop.f32.mrb[0].mxu0
      %v712 = vadd.f32 0.0, %v711
      %v713 = vpop.f32.mrb[0].mxu0
      %714 = vmatprep.mubr.f32.mxu0 0.0
      %715 = vmatmul.mubr.f32.gmra.mrb[0].mxu0 %v497
      %v716 = vpop.f32.mrb[0].mxu0
      %v717 = vadd.f32 0.0, %v716
      %v718 = vpop.f32.mrb[0].mxu0
      %719 = vmatprep.mubr.f32.mxu0 0.0
      %720 = vmatmul.mubr.f32.gmra.mrb[0].mxu0 %v500
      %v721 = vpop.f32.mrb[0].mxu0
      %v722 = vadd.f32 0.0, %v721
      %v723 = vpop.f32.mrb[0].mxu0
      %724 = vmatprep.mubr.f32.mxu0 0.0
      %725 = vmatmul.mubr.f32.gmra.mrb[0].mxu0 %v503
      %v726 = vpop.f32.mrb[0].mxu0
      %v727 = vadd.f32 0.0, %v726
      %v728 = vpop.f32.mrb[0].mxu0
      %729 = vdwg.mxu0
      %v731 = vsel %vm408, %v311, 0
      %v734 = vsel %vm408, %v312, 0
      %v737 = vsel %vm408, %v313, 0
      %v740 = vsel %vm408, %v314, 0
      %v743 = vsel %vm408, %v315, 0
      %v746 = vsel %vm408, %v316, 0
      %v749 = vsel %vm408, %v317, 0
      %v752 = vsel %vm408, %v318, 0
      %v755 = vsel %vm408, %v319, 0
      %v758 = vsel %vm408, %v320, 0
      %v761 = vsel %vm408, %v321, 0
      %v764 = vsel %vm408, %v322, 0
      %v767 = vsel %vm408, %v323, 0
      %v770 = vsel %vm408, %v324, 0
      %v773 = vsel %vm408, %v325, 0
      %v776 = vsel %vm408, %v326, 0
      %v779 = vsel %vm408, %v327, 0
      %v782 = vsel %vm408, %v328, 0
      %v785 = vsel %vm408, %v329, 0
      %v788 = vsel %vm408, %v330, 0
      %v791 = vsel %vm408, %v331, 0
      %v794 = vsel %vm408, %v332, 0
      %v797 = vsel %vm408, %v333, 0
      %v800 = vsel %vm408, %v334, 0
      %v803 = vsel %vm408, %v335, 0
      %v806 = vsel %vm408, %v336, 0
      %v809 = vsel %vm408, %v337, 0
      %v812 = vsel %vm408, %v338, 0
      %v815 = vsel %vm408, %v339, 0
      %v818 = vsel %vm408, %v340, 0
      %v821 = vsel %vm408, %v341, 0
      %v824 = vsel %vm408, %v342, 0
      %826 = vmatprep.subr.mxu0 0.0
      %827 = vmatpush1.msra.mxu0 %v273
      %828 = vmatprep.subr.mxu0 0.0
      %829 = vmatpush1.msra.mxu0 %v278
      %830 = vmatprep.subr.mxu0 0.0
      %831 = vmatpush1.msra.mxu0 %v283
      %832 = vmatprep.subr.mxu0 0.0
      %833 = vmatpush1.msra.mxu0 %v288
      %834 = vmatprep.subr.mxu0 0.0
      %835 = vmatpush1.msra.mxu0 %v293
      %836 = vmatprep.subr.mxu0 0.0
      %837 = vmatpush1.msra.mxu0 %v298
      %838 = vmatprep.subr.mxu0 0.0
      %839 = vmatpush1.msra.mxu0 %v303
      %840 = vmatprep.subr.mxu0 0.0
      %841 = vmatpush1.msra.mxu0 %v308
      %842 = vmatprep.subr.mxu0 0.0
      %843 = vmatpush1.msra.mxu0 0.0
      %844 = vmatprep.subr.mxu0 0.0
      %845 = vmatpush1.msra.mxu0 0.0
      %846 = vmatprep.subr.mxu0 0.0
      %847 = vmatpush1.msra.mxu0 0.0
      %848 = vmatprep.subr.mxu0 0.0
      %849 = vmatpush1.msra.mxu0 0.0
      %850 = vmatprep.subr.mxu0 0.0
      %851 = vmatpush1.msra.mxu0 0.0
      %852 = vmatprep.subr.mxu0 0.0
      %853 = vmatpush1.msra.mxu0 0.0
      %854 = vmatprep.subr.mxu0 0.0
      %855 = vmatpush1.msra.mxu0 0.0
      %856 = vmatprep.subr.mxu0 0.0
      %857 = vmatpush1.msra.mxu0 0.0
      %858 = vmatprep.subr.mxu0 0.0
      %859 = vmatpush1.msra.mxu0 0.0
      %860 = vmatprep.subr.mxu0 0.0
      %861 = vmatpush1.msra.mxu0 0.0
      %862 = vmatprep.subr.mxu0 0.0
      %863 = vmatpush1.msra.mxu0 0.0
      %864 = vmatprep.subr.mxu0 0.0
      %865 = vmatpush1.msra.mxu0 0.0
      %866 = vmatprep.subr.mxu0 0.0
      %867 = vmatpush1.msra.mxu0 0.0
      %868 = vmatprep.subr.mxu0 0.0
      %869 = vmatpush1.msra.mxu0 0.0
      %870 = vmatprep.subr.mxu0 0.0
      %871 = vmatpush1.msra.mxu0 0.0
      %872 = vmatprep.subr.mxu0 0.0
      %873 = vmatpush1.msra.mxu0 0.0
      %874 = vmatprep.subr.mxu0 0.0
      %875 = vmatpush1.msra.mxu0 0.0
      %876 = vmatprep.subr.mxu0 0.0
      %877 = vmatpush1.msra.mxu0 0.0
      %878 = vmatprep.subr.mxu0 0.0
      %879 = vmatpush1.msra.mxu0 0.0
      %880 = vmatprep.subr.mxu0 0.0
      %881 = vmatpush1.msra.mxu0 0.0
      %882 = vmatprep.subr.mxu0 0.0
      %883 = vmatpush1.msra.mxu0 0.0
      %884 = vmatprep.subr.mxu0 0.0
      %885 = vmatpush1.msra.mxu0 0.0
      %886 = vmatprep.subr.mxu0 0.0
      %887 = vmatpush1.msra.mxu0 0.0
      %888 = vmatprep.subr.mxu0 0.0
      %889 = vmatpush1.msra.mxu0 0.0
      %890 = vmatprep.mubr.f32.mxu0 0.0
      %891 = vmatmul.mubr.f32.gmra.mrb[0].mxu0 %v731
      %v892 = vpop.f32.mrb[0].mxu0
      %v893 = vadd.f32 %v572, %v892
      %v894 = vpop.f32.mrb[0].mxu0
      %895 = vmatprep.mubr.f32.mxu0 0.0
      %896 = vmatmul.mubr.f32.gmra.mrb[0].mxu0 %v734
      %v897 = vpop.f32.mrb[0].mxu0
      %v898 = vadd.f32 %v577, %v897
      %v899 = vpop.f32.mrb[0].mxu0
      %900 = vmatprep.mubr.f32.mxu0 0.0
      %901 = vmatmul.mubr.f32.gmra.mrb[0].mxu0 %v737
      %v902 = vpop.f32.mrb[0].mxu0
      %v903 = vadd.f32 %v582, %v902
      %v904 = vpop.f32.mrb[0].mxu0
      %905 = vmatprep.mubr.f32.mxu0 0.0
      %906 = vmatmul.mubr.f32.gmra.mrb[0].mxu0 %v740
      %v907 = vpop.f32.mrb[0].mxu0
      %v908 = vadd.f32 %v587, %v907
      %v909 = vpop.f32.mrb[0].mxu0
      %910 = vmatprep.mubr.f32.mxu0 0.0
      %911 = vmatmul.mubr.f32.gmra.mrb[0].mxu0 %v743
      %v912 = vpop.f32.mrb[0].mxu0
      %v913 = vadd.f32 %v592, %v912
      %v914 = vpop.f32.mrb[0].mxu0
      %915 = vmatprep.mubr.f32.mxu0 0.0
      %916 = vmatmul.mubr.f32.gmra.mrb[0].mxu0 %v746
      %v917 = vpop.f32.mrb[0].mxu0
      %v918 = vadd.f32 %v597, %v917
      %v919 = vpop.f32.mrb[0].mxu0
      %920 = vmatprep.mubr.f32.mxu0 0.0
      %921 = vmatmul.mubr.f32.gmra.mrb[0].mxu0 %v749
      %v922 = vpop.f32.mrb[0].mxu0
      %v923 = vadd.f32 %v602, %v922
      %v924 = vpop.f32.mrb[0].mxu0
      %925 = vmatprep.mubr.f32.mxu0 0.0
      %926 = vmatmul.mubr.f32.gmra.mrb[0].mxu0 %v752
      %v927 = vpop.f32.mrb[0].mxu0
      %v928 = vadd.f32 %v607, %v927
      %v929 = vpop.f32.mrb[0].mxu0
      %930 = vmatprep.mubr.f32.mxu0 0.0
      %931 = vmatmul.mubr.f32.gmra.mrb[0].mxu0 %v755
      %v932 = vpop.f32.mrb[0].mxu0
      %v933 = vadd.f32 %v612, %v932
      %v934 = vpop.f32.mrb[0].mxu0
      %935 = vmatprep.mubr.f32.mxu0 0.0
      %936 = vmatmul.mubr.f32.gmra.mrb[0].mxu0 %v758
      %v937 = vpop.f32.mrb[0].mxu0
      %v938 = vadd.f32 %v617, %v937
      %v939 = vpop.f32.mrb[0].mxu0
      %940 = vmatprep.mubr.f32.mxu0 0.0
      %941 = vmatmul.mubr.f32.gmra.mrb[0].mxu0 %v761
      %v942 = vpop.f32.mrb[0].mxu0
      %v943 = vadd.f32 %v622, %v942
      %v944 = vpop.f32.mrb[0].mxu0
      %945 = vmatprep.mubr.f32.mxu0 0.0
      %946 = vmatmul.mubr.f32.gmra.mrb[0].mxu0 %v764
      %v947 = vpop.f32.mrb[0].mxu0
      %v948 = vadd.f32 %v627, %v947
      %v949 = vpop.f32.mrb[0].mxu0
      %950 = vmatprep.mubr.f32.mxu0 0.0
      %951 = vmatmul.mubr.f32.gmra.mrb[0].mxu0 %v767
      %v952 = vpop.f32.mrb[0].mxu0
      %v953 = vadd.f32 %v632, %v952
      %v954 = vpop.f32.mrb[0].mxu0
      %955 = vmatprep.mubr.f32.mxu0 0.0
      %956 = vmatmul.mubr.f32.gmra.mrb[0].mxu0 %v770
      %v957 = vpop.f32.mrb[0].mxu0
      %v958 = vadd.f32 %v637, %v957
      %v959 = vpop.f32.mrb[0].mxu0
      %960 = vmatprep.mubr.f32.mxu0 0.0
      %961 = vmatmul.mubr.f32.gmra.mrb[0].mxu0 %v773
      %v962 = vpop.f32.mrb[0].mxu0
      %v963 = vadd.f32 %v642, %v962
      %v964 = vpop.f32.mrb[0].mxu0
      %965 = vmatprep.mubr.f32.mxu0 0.0
      %966 = vmatmul.mubr.f32.gmra.mrb[0].mxu0 %v776
      %v967 = vpop.f32.mrb[0].mxu0
      %v968 = vadd.f32 %v647, %v967
      %v969 = vpop.f32.mrb[0].mxu0
      %970 = vmatprep.mubr.f32.mxu0 0.0
      %971 = vmatmul.mubr.f32.gmra.mrb[0].mxu0 %v779
      %v972 = vpop.f32.mrb[0].mxu0
      %v973 = vadd.f32 %v652, %v972
      %v974 = vpop.f32.mrb[0].mxu0
      %975 = vmatprep.mubr.f32.mxu0 0.0
      %976 = vmatmul.mubr.f32.gmra.mrb[0].mxu0 %v782
      %v977 = vpop.f32.mrb[0].mxu0
      %v978 = vadd.f32 %v657, %v977
      %v979 = vpop.f32.mrb[0].mxu0
      %980 = vmatprep.mubr.f32.mxu0 0.0
      %981 = vmatmul.mubr.f32.gmra.mrb[0].mxu0 %v785
      %v982 = vpop.f32.mrb[0].mxu0
      %v983 = vadd.f32 %v662, %v982
      %v984 = vpop.f32.mrb[0].mxu0
      %985 = vmatprep.mubr.f32.mxu0 0.0
      %986 = vmatmul.mubr.f32.gmra.mrb[0].mxu0 %v788
      %v987 = vpop.f32.mrb[0].mxu0
      %v988 = vadd.f32 %v667, %v987
      %v989 = vpop.f32.mrb[0].mxu0
      %990 = vmatprep.mubr.f32.mxu0 0.0
      %991 = vmatmul.mubr.f32.gmra.mrb[0].mxu0 %v791
      %v992 = vpop.f32.mrb[0].mxu0
      %v993 = vadd.f32 %v672, %v992
      %v994 = vpop.f32.mrb[0].mxu0
      %995 = vmatprep.mubr.f32.mxu0 0.0
      %996 = vmatmul.mubr.f32.gmra.mrb[0].mxu0 %v794
      %v997 = vpop.f32.mrb[0].mxu0
      %v998 = vadd.f32 %v677, %v997
      %v999 = vpop.f32.mrb[0].mxu0
      %1000 = vmatprep.mubr.f32.mxu0 0.0
      %1001 = vmatmul.mubr.f32.gmra.mrb[0].mxu0 %v797
      %v1002 = vpop.f32.mrb[0].mxu0
      %v1003 = vadd.f32 %v682, %v1002
      %v1004 = vpop.f32.mrb[0].mxu0
      %1005 = vmatprep.mubr.f32.mxu0 0.0
      %1006 = vmatmul.mubr.f32.gmra.mrb[0].mxu0 %v800
      %v1007 = vpop.f32.mrb[0].mxu0
      %v1008 = vadd.f32 %v687, %v1007
      %v1009 = vpop.f32.mrb[0].mxu0
      %1010 = vmatprep.mubr.f32.mxu0 0.0
      %1011 = vmatmul.mubr.f32.gmra.mrb[0].mxu0 %v803
      %v1012 = vpop.f32.mrb[0].mxu0
      %v1013 = vadd.f32 %v692, %v1012
      %v1014 = vpop.f32.mrb[0].mxu0
      %1015 = vmatprep.mubr.f32.mxu0 0.0
      %1016 = vmatmul.mubr.f32.gmra.mrb[0].mxu0 %v806
      %v1017 = vpop.f32.mrb[0].mxu0
      %v1018 = vadd.f32 %v697, %v1017
      %v1019 = vpop.f32.mrb[0].mxu0
      %1020 = vmatprep.mubr.f32.mxu0 0.0
      %1021 = vmatmul.mubr.f32.gmra.mrb[0].mxu0 %v809
      %v1022 = vpop.f32.mrb[0].mxu0
      %v1023 = vadd.f32 %v702, %v1022
      %v1024 = vpop.f32.mrb[0].mxu0
      %1025 = vmatprep.mubr.f32.mxu0 0.0
      %1026 = vmatmul.mubr.f32.gmra.mrb[0].mxu0 %v812
      %v1027 = vpop.f32.mrb[0].mxu0
      %v1028 = vadd.f32 %v707, %v1027
      %v1029 = vpop.f32.mrb[0].mxu0
      %1030 = vmatprep.mubr.f32.mxu0 0.0
      %1031 = vmatmul.mubr.f32.gmra.mrb[0].mxu0 %v815
      %v1032 = vpop.f32.mrb[0].mxu0
      %v1033 = vadd.f32 %v712, %v1032
      %v1034 = vpop.f32.mrb[0].mxu0
      %1035 = vmatprep.mubr.f32.mxu0 0.0
      %1036 = vmatmul.mubr.f32.gmra.mrb[0].mxu0 %v818
      %v1037 = vpop.f32.mrb[0].mxu0
      %v1038 = vadd.f32 %v717, %v1037
      %v1039 = vpop.f32.mrb[0].mxu0
      %1040 = vmatprep.mubr.f32.mxu0 0.0
      %1041 = vmatmul.mubr.f32.gmra.mrb[0].mxu0 %v821
      %v1042 = vpop.f32.mrb[0].mxu0
      %v1043 = vadd.f32 %v722, %v1042
      %v1044 = vpop.f32.mrb[0].mxu0
      %1045 = vmatprep.mubr.f32.mxu0 0.0
      %1046 = vmatmul.mubr.f32.gmra.mrb[0].mxu0 %v824
      %v1047 = vpop.f32.mrb[0].mxu0
      %v1048 = vadd.f32 %v727, %v1047
      %v1049 = vpop.f32.mrb[0].mxu0
      %1050 = vdwg.mxu0
      %s1051 = scalar_lea.vmem %s2, 512
      %v1052 = vld [vmem:[%s1051] sm:$0xff]
      %v1053 = vld [vmem:[%s1051 + $0x8] sm:$0xff]
      %v1054 = vld [vmem:[%s1051 + $0x10] sm:$0xff]
      %v1055 = vld [vmem:[%s1051 + $0x18] sm:$0xff]
      %v1056 = vld [vmem:[%s1051 + $0x20] sm:$0xff]
      %v1057 = vld [vmem:[%s1051 + $0x28] sm:$0xff]
      %v1058 = vld [vmem:[%s1051 + $0x30] sm:$0xff]
      %v1059 = vld [vmem:[%s1051 + $0x38] sm:$0xff]
      %v1060 = vld [vmem:[%s1051 + $0x40] sm:$0xff]
      %v1061 = vld [vmem:[%s1051 + $0x48] sm:$0xff]
      %v1062 = vld [vmem:[%s1051 + $0x50] sm:$0xff]
      %v1063 = vld [vmem:[%s1051 + $0x58] sm:$0xff]
      %v1064 = vld [vmem:[%s1051 + $0x60] sm:$0xff]
      %v1065 = vld [vmem:[%s1051 + $0x68] sm:$0xff]
      %v1066 = vld [vmem:[%s1051 + $0x70] sm:$0xff]
      %v1067 = vld [vmem:[%s1051 + $0x78] sm:$0xff]
      %v1068 = vld [vmem:[%s1051 + $0x80] sm:$0xff]
      %v1069 = vld [vmem:[%s1051 + $0x88] sm:$0xff]
      %v1070 = vld [vmem:[%s1051 + $0x90] sm:$0xff]
      %v1071 = vld [vmem:[%s1051 + $0x98] sm:$0xff]
      %v1072 = vld [vmem:[%s1051 + $0xa0] sm:$0xff]
      %v1073 = vld [vmem:[%s1051 + $0xa8] sm:$0xff]
      %v1074 = vld [vmem:[%s1051 + $0xb0] sm:$0xff]
      %v1075 = vld [vmem:[%s1051 + $0xb8] sm:$0xff]
      %v1076 = vld [vmem:[%s1051 + $0xc0] sm:$0xff]
      %v1077 = vld [vmem:[%s1051 + $0xc8] sm:$0xff]
      %v1078 = vld [vmem:[%s1051 + $0xd0] sm:$0xff]
      %v1079 = vld [vmem:[%s1051 + $0xd8] sm:$0xff]
      %v1080 = vld [vmem:[%s1051 + $0xe0] sm:$0xff]
      %v1081 = vld [vmem:[%s1051 + $0xe8] sm:$0xff]
      %v1082 = vld [vmem:[%s1051 + $0xf0] sm:$0xff]
      %v1083 = vld [vmem:[%s1051 + $0xf8] sm:$0xff]
      %1084 = vrot.lane.b32.xlu0 %v273, 126
      %v1085 = vpop.permute.xlu0 %1084
      %1086 = vrot.lane.b32.xlu0 %v278, 126
      %v1087 = vpop.permute.xlu0 %1086
      %1088 = vrot.lane.b32.xlu0 %v283, 126
      %v1089 = vpop.permute.xlu0 %1088
      %1090 = vrot.lane.b32.xlu0 %v288, 126
      %v1091 = vpop.permute.xlu0 %1090
      %1092 = vrot.lane.b32.xlu0 %v293, 126
      %v1093 = vpop.permute.xlu0 %1092
      %1094 = vrot.lane.b32.xlu0 %v298, 126
      %v1095 = vpop.permute.xlu0 %1094
      %1096 = vrot.lane.b32.xlu0 %v303, 126
      %v1097 = vpop.permute.xlu0 %1096
      %1098 = vrot.lane.b32.xlu0 %v308, 126
      %v1099 = vpop.permute.xlu0 %1098
      %v1109 = vsel %vm408, %v1052, 0
      %v1112 = vsel %vm408, %v1053, 0
      %v1115 = vsel %vm408, %v1054, 0
      %v1118 = vsel %vm408, %v1055, 0
      %v1121 = vsel %vm408, %v1056, 0
      %v1124 = vsel %vm408, %v1057, 0
      %v1127 = vsel %vm408, %v1058, 0
      %v1130 = vsel %vm408, %v1059, 0
      %v1133 = vsel %vm408, %v1060, 0
      %v1136 = vsel %vm408, %v1061, 0
      %v1139 = vsel %vm408, %v1062, 0
      %v1142 = vsel %vm408, %v1063, 0
      %v1145 = vsel %vm408, %v1064, 0
      %v1148 = vsel %vm408, %v1065, 0
      %v1151 = vsel %vm408, %v1066, 0
      %v1154 = vsel %vm408, %v1067, 0
      %v1157 = vsel %vm408, %v1068, 0
      %v1160 = vsel %vm408, %v1069, 0
      %v1163 = vsel %vm408, %v1070, 0
      %v1166 = vsel %vm408, %v1071, 0
      %v1169 = vsel %vm408, %v1072, 0
      %v1172 = vsel %vm408, %v1073, 0
      %v1175 = vsel %vm408, %v1074, 0
      %v1178 = vsel %vm408, %v1075, 0
      %v1181 = vsel %vm408, %v1076, 0
      %v1184 = vsel %vm408, %v1077, 0
      %v1187 = vsel %vm408, %v1078, 0
      %v1190 = vsel %vm408, %v1079, 0
      %v1193 = vsel %vm408, %v1080, 0
      %v1196 = vsel %vm408, %v1081, 0
      %v1199 = vsel %vm408, %v1082, 0
      %v1202 = vsel %vm408, %v1083, 0
      %1204 = vmatprep.subr.mxu0 0.0
      %1205 = vmatpush1.msra.mxu0 %v1085
      %1206 = vmatprep.subr.mxu0 0.0
      %1207 = vmatpush1.msra.mxu0 %v1087
      %1208 = vmatprep.subr.mxu0 0.0
      %1209 = vmatpush1.msra.mxu0 %v1089
      %1210 = vmatprep.subr.mxu0 0.0
      %1211 = vmatpush1.msra.mxu0 %v1091
      %1212 = vmatprep.subr.mxu0 0.0
      %1213 = vmatpush1.msra.mxu0 %v1093
      %1214 = vmatprep.subr.mxu0 0.0
      %1215 = vmatpush1.msra.mxu0 %v1095
      %1216 = vmatprep.subr.mxu0 0.0
      %1217 = vmatpush1.msra.mxu0 %v1097
      %1218 = vmatprep.subr.mxu0 0.0
      %1219 = vmatpush1.msra.mxu0 %v1099
      %1220 = vmatprep.subr.mxu0 0.0
      %1221 = vmatpush1.msra.mxu0 0.0
      %1222 = vmatprep.subr.mxu0 0.0
      %1223 = vmatpush1.msra.mxu0 0.0
      %1224 = vmatprep.subr.mxu0 0.0
      %1225 = vmatpush1.msra.mxu0 0.0
      %1226 = vmatprep.subr.mxu0 0.0
      %1227 = vmatpush1.msra.mxu0 0.0
      %1228 = vmatprep.subr.mxu0 0.0
      %1229 = vmatpush1.msra.mxu0 0.0
      %1230 = vmatprep.subr.mxu0 0.0
      %1231 = vmatpush1.msra.mxu0 0.0
      %1232 = vmatprep.subr.mxu0 0.0
      %1233 = vmatpush1.msra.mxu0 0.0
      %1234 = vmatprep.subr.mxu0 0.0
      %1235 = vmatpush1.msra.mxu0 0.0
      %1236 = vmatprep.subr.mxu0 0.0
      %1237 = vmatpush1.msra.mxu0 0.0
      %1238 = vmatprep.subr.mxu0 0.0
      %1239 = vmatpush1.msra.mxu0 0.0
      %1240 = vmatprep.subr.mxu0 0.0
      %1241 = vmatpush1.msra.mxu0 0.0
      %1242 = vmatprep.subr.mxu0 0.0
      %1243 = vmatpush1.msra.mxu0 0.0
      %1244 = vmatprep.subr.mxu0 0.0
      %1245 = vmatpush1.msra.mxu0 0.0
      %1246 = vmatprep.subr.mxu0 0.0
      %1247 = vmatpush1.msra.mxu0 0.0
      %1248 = vmatprep.subr.mxu0 0.0
      %1249 = vmatpush1.msra.mxu0 0.0
      %1250 = vmatprep.subr.mxu0 0.0
      %1251 = vmatpush1.msra.mxu0 0.0
      %1252 = vmatprep.subr.mxu0 0.0
      %1253 = vmatpush1.msra.mxu0 0.0
      %1254 = vmatprep.subr.mxu0 0.0
      %1255 = vmatpush1.msra.mxu0 0.0
      %1256 = vmatprep.subr.mxu0 0.0
      %1257 = vmatpush1.msra.mxu0 0.0
      %1258 = vmatprep.subr.mxu0 0.0
      %1259 = vmatpush1.msra.mxu0 0.0
      %1260 = vmatprep.subr.mxu0 0.0
      %1261 = vmatpush1.msra.mxu0 0.0
      %1262 = vmatprep.subr.mxu0 0.0
      %1263 = vmatpush1.msra.mxu0 0.0
      %1264 = vmatprep.subr.mxu0 0.0
      %1265 = vmatpush1.msra.mxu0 0.0
      %1266 = vmatprep.subr.mxu0 0.0
      %1267 = vmatpush1.msra.mxu0 0.0
      %1268 = vmatprep.mubr.f32.mxu0 0.0
      %1269 = vmatmul.mubr.f32.gmra.mrb[0].mxu0 %v1109
      %v1270 = vpop.f32.mrb[0].mxu0
      %v1271 = vadd.f32 0.0, %v1270
      %v1272 = vpop.f32.mrb[0].mxu0
      %1273 = vmatprep.mubr.f32.mxu0 0.0
      %1274 = vmatmul.mubr.f32.gmra.mrb[0].mxu0 %v1112
      %v1275 = vpop.f32.mrb[0].mxu0
      %v1276 = vadd.f32 0.0, %v1275
      %v1277 = vpop.f32.mrb[0].mxu0
      %1278 = vmatprep.mubr.f32.mxu0 0.0
      %1279 = vmatmul.mubr.f32.gmra.mrb[0].mxu0 %v1115
      %v1280 = vpop.f32.mrb[0].mxu0
      %v1281 = vadd.f32 0.0, %v1280
      %v1282 = vpop.f32.mrb[0].mxu0
      %1283 = vmatprep.mubr.f32.mxu0 0.0
      %1284 = vmatmul.mubr.f32.gmra.mrb[0].mxu0 %v1118
      %v1285 = vpop.f32.mrb[0].mxu0
      %v1286 = vadd.f32 0.0, %v1285
      %v1287 = vpop.f32.mrb[0].mxu0
      %1288 = vmatprep.mubr.f32.mxu0 0.0
      %1289 = vmatmul.mubr.f32.gmra.mrb[0].mxu0 %v1121
      %v1290 = vpop.f32.mrb[0].mxu0
      %v1291 = vadd.f32 0.0, %v1290
      %v1292 = vpop.f32.mrb[0].mxu0
      %1293 = vmatprep.mubr.f32.mxu0 0.0
      %1294 = vmatmul.mubr.f32.gmra.mrb[0].mxu0 %v1124
      %v1295 = vpop.f32.mrb[0].mxu0
      %v1296 = vadd.f32 0.0, %v1295
      %v1297 = vpop.f32.mrb[0].mxu0
      %1298 = vmatprep.mubr.f32.mxu0 0.0
      %1299 = vmatmul.mubr.f32.gmra.mrb[0].mxu0 %v1127
      %v1300 = vpop.f32.mrb[0].mxu0
      %v1301 = vadd.f32 0.0, %v1300
      %v1302 = vpop.f32.mrb[0].mxu0
      %1303 = vmatprep.mubr.f32.mxu0 0.0
      %1304 = vmatmul.mubr.f32.gmra.mrb[0].mxu0 %v1130
      %v1305 = vpop.f32.mrb[0].mxu0
      %v1306 = vadd.f32 0.0, %v1305
      %v1307 = vpop.f32.mrb[0].mxu0
      %1308 = vmatprep.mubr.f32.mxu0 0.0
      %1309 = vmatmul.mubr.f32.gmra.mrb[0].mxu0 %v1133
      %v1310 = vpop.f32.mrb[0].mxu0
      %v1311 = vadd.f32 0.0, %v1310
      %v1312 = vpop.f32.mrb[0].mxu0
      %1313 = vmatprep.mubr.f32.mxu0 0.0
      %1314 = vmatmul.mubr.f32.gmra.mrb[0].mxu0 %v1136
      %v1315 = vpop.f32.mrb[0].mxu0
      %v1316 = vadd.f32 0.0, %v1315
      %v1317 = vpop.f32.mrb[0].mxu0
      %1318 = vmatprep.mubr.f32.mxu0 0.0
      %1319 = vmatmul.mubr.f32.gmra.mrb[0].mxu0 %v1139
      %v1320 = vpop.f32.mrb[0].mxu0
      %v1321 = vadd.f32 0.0, %v1320
      %v1322 = vpop.f32.mrb[0].mxu0
      %1323 = vmatprep.mubr.f32.mxu0 0.0
      %1324 = vmatmul.mubr.f32.gmra.mrb[0].mxu0 %v1142
      %v1325 = vpop.f32.mrb[0].mxu0
      %v1326 = vadd.f32 0.0, %v1325
      %v1327 = vpop.f32.mrb[0].mxu0
      %1328 = vmatprep.mubr.f32.mxu0 0.0
      %1329 = vmatmul.mubr.f32.gmra.mrb[0].mxu0 %v1145
      %v1330 = vpop.f32.mrb[0].mxu0
      %v1331 = vadd.f32 0.0, %v1330
      %v1332 = vpop.f32.mrb[0].mxu0
      %1333 = vmatprep.mubr.f32.mxu0 0.0
      %1334 = vmatmul.mubr.f32.gmra.mrb[0].mxu0 %v1148
      %v1335 = vpop.f32.mrb[0].mxu0
      %v1336 = vadd.f32 0.0, %v1335
      %v1337 = vpop.f32.mrb[0].mxu0
      %1338 = vmatprep.mubr.f32.mxu0 0.0
      %1339 = vmatmul.mubr.f32.gmra.mrb[0].mxu0 %v1151
      %v1340 = vpop.f32.mrb[0].mxu0
      %v1341 = vadd.f32 0.0, %v1340
      %v1342 = vpop.f32.mrb[0].mxu0
      %1343 = vmatprep.mubr.f32.mxu0 0.0
      %1344 = vmatmul.mubr.f32.gmra.mrb[0].mxu0 %v1154
      %v1345 = vpop.f32.mrb[0].mxu0
      %v1346 = vadd.f32 0.0, %v1345
      %v1347 = vpop.f32.mrb[0].mxu0
      %1348 = vmatprep.mubr.f32.mxu0 0.0
      %1349 = vmatmul.mubr.f32.gmra.mrb[0].mxu0 %v1157
      %v1350 = vpop.f32.mrb[0].mxu0
      %v1351 = vadd.f32 0.0, %v1350
      %v1352 = vpop.f32.mrb[0].mxu0
      %1353 = vmatprep.mubr.f32.mxu0 0.0
      %1354 = vmatmul.mubr.f32.gmra.mrb[0].mxu0 %v1160
      %v1355 = vpop.f32.mrb[0].mxu0
      %v1356 = vadd.f32 0.0, %v1355
      %v1357 = vpop.f32.mrb[0].mxu0
      %1358 = vmatprep.mubr.f32.mxu0 0.0
      %1359 = vmatmul.mubr.f32.gmra.mrb[0].mxu0 %v1163
      %v1360 = vpop.f32.mrb[0].mxu0
      %v1361 = vadd.f32 0.0, %v1360
      %v1362 = vpop.f32.mrb[0].mxu0
      %1363 = vmatprep.mubr.f32.mxu0 0.0
      %1364 = vmatmul.mubr.f32.gmra.mrb[0].mxu0 %v1166
      %v1365 = vpop.f32.mrb[0].mxu0
      %v1366 = vadd.f32 0.0, %v1365
      %v1367 = vpop.f32.mrb[0].mxu0
      %1368 = vmatprep.mubr.f32.mxu0 0.0
      %1369 = vmatmul.mubr.f32.gmra.mrb[0].mxu0 %v1169
      %v1370 = vpop.f32.mrb[0].mxu0
      %v1371 = vadd.f32 0.0, %v1370
      %v1372 = vpop.f32.mrb[0].mxu0
      %1373 = vmatprep.mubr.f32.mxu0 0.0
      %1374 = vmatmul.mubr.f32.gmra.mrb[0].mxu0 %v1172
      %v1375 = vpop.f32.mrb[0].mxu0
      %v1376 = vadd.f32 0.0, %v1375
      %v1377 = vpop.f32.mrb[0].mxu0
      %1378 = vmatprep.mubr.f32.mxu0 0.0
      %1379 = vmatmul.mubr.f32.gmra.mrb[0].mxu0 %v1175
      %v1380 = vpop.f32.mrb[0].mxu0
      %v1381 = vadd.f32 0.0, %v1380
      %v1382 = vpop.f32.mrb[0].mxu0
      %1383 = vmatprep.mubr.f32.mxu0 0.0
      %1384 = vmatmul.mubr.f32.gmra.mrb[0].mxu0 %v1178
      %v1385 = vpop.f32.mrb[0].mxu0
      %v1386 = vadd.f32 0.0, %v1385
      %v1387 = vpop.f32.mrb[0].mxu0
      %1388 = vmatprep.mubr.f32.mxu0 0.0
      %1389 = vmatmul.mubr.f32.gmra.mrb[0].mxu0 %v1181
      %v1390 = vpop.f32.mrb[0].mxu0
      %v1391 = vadd.f32 0.0, %v1390
      %v1392 = vpop.f32.mrb[0].mxu0
      %1393 = vmatprep.mubr.f32.mxu0 0.0
      %1394 = vmatmul.mubr.f32.gmra.mrb[0].mxu0 %v1184
      %v1395 = vpop.f32.mrb[0].mxu0
      %v1396 = vadd.f32 0.0, %v1395
      %v1397 = vpop.f32.mrb[0].mxu0
      %1398 = vmatprep.mubr.f32.mxu0 0.0
      %1399 = vmatmul.mubr.f32.gmra.mrb[0].mxu0 %v1187
      %v1400 = vpop.f32.mrb[0].mxu0
      %v1401 = vadd.f32 0.0, %v1400
      %v1402 = vpop.f32.mrb[0].mxu0
      %1403 = vmatprep.mubr.f32.mxu0 0.0
      %1404 = vmatmul.mubr.f32.gmra.mrb[0].mxu0 %v1190
      %v1405 = vpop.f32.mrb[0].mxu0
      %v1406 = vadd.f32 0.0, %v1405
      %v1407 = vpop.f32.mrb[0].mxu0
      %1408 = vmatprep.mubr.f32.mxu0 0.0
      %1409 = vmatmul.mubr.f32.gmra.mrb[0].mxu0 %v1193
      %v1410 = vpop.f32.mrb[0].mxu0
      %v1411 = vadd.f32 0.0, %v1410
      %v1412 = vpop.f32.mrb[0].mxu0
      %1413 = vmatprep.mubr.f32.mxu0 0.0
      %1414 = vmatmul.mubr.f32.gmra.mrb[0].mxu0 %v1196
      %v1415 = vpop.f32.mrb[0].mxu0
      %v1416 = vadd.f32 0.0, %v1415
      %v1417 = vpop.f32.mrb[0].mxu0
      %1418 = vmatprep.mubr.f32.mxu0 0.0
      %1419 = vmatmul.mubr.f32.gmra.mrb[0].mxu0 %v1199
      %v1420 = vpop.f32.mrb[0].mxu0
      %v1421 = vadd.f32 0.0, %v1420
      %v1422 = vpop.f32.mrb[0].mxu0
      %1423 = vmatprep.mubr.f32.mxu0 0.0
      %1424 = vmatmul.mubr.f32.gmra.mrb[0].mxu0 %v1202
      %v1425 = vpop.f32.mrb[0].mxu0
      %v1426 = vadd.f32 0.0, %v1425
      %v1427 = vpop.f32.mrb[0].mxu0
      %1428 = vdwg.mxu0
      %v1429 = vadd.f32 %v893, %v1271
      %v1430 = vadd.f32 %v898, %v1276
      %v1431 = vadd.f32 %v903, %v1281
      %v1432 = vadd.f32 %v908, %v1286
      %v1433 = vadd.f32 %v913, %v1291
      %v1434 = vadd.f32 %v918, %v1296
      %v1435 = vadd.f32 %v923, %v1301
      %v1436 = vadd.f32 %v928, %v1306
      %v1437 = vadd.f32 %v933, %v1311
      %v1438 = vadd.f32 %v938, %v1316
      %v1439 = vadd.f32 %v943, %v1321
      %v1440 = vadd.f32 %v948, %v1326
      %v1441 = vadd.f32 %v953, %v1331
      %v1442 = vadd.f32 %v958, %v1336
      %v1443 = vadd.f32 %v963, %v1341
      %v1444 = vadd.f32 %v968, %v1346
      %v1445 = vadd.f32 %v973, %v1351
      %v1446 = vadd.f32 %v978, %v1356
      %v1447 = vadd.f32 %v983, %v1361
      %v1448 = vadd.f32 %v988, %v1366
      %v1449 = vadd.f32 %v993, %v1371
      %v1450 = vadd.f32 %v998, %v1376
      %v1451 = vadd.f32 %v1003, %v1381
      %v1452 = vadd.f32 %v1008, %v1386
      %v1453 = vadd.f32 %v1013, %v1391
      %v1454 = vadd.f32 %v1018, %v1396
      %v1455 = vadd.f32 %v1023, %v1401
      %v1456 = vadd.f32 %v1028, %v1406
      %v1457 = vadd.f32 %v1033, %v1411
      %v1458 = vadd.f32 %v1038, %v1416
      %v1459 = vadd.f32 %v1043, %v1421
      %v1460 = vadd.f32 %v1048, %v1426
      %s1461 = scalar_lea.vmem %s2, 768
      %v1462 = vld [vmem:[%s1461] sm:$0xff]
      %v1463 = vld [vmem:[%s1461 + $0x8] sm:$0xff]
      %v1464 = vld [vmem:[%s1461 + $0x10] sm:$0xff]
      %v1465 = vld [vmem:[%s1461 + $0x18] sm:$0xff]
      %v1466 = vld [vmem:[%s1461 + $0x20] sm:$0xff]
      %v1467 = vld [vmem:[%s1461 + $0x28] sm:$0xff]
      %v1468 = vld [vmem:[%s1461 + $0x30] sm:$0xff]
      %v1469 = vld [vmem:[%s1461 + $0x38] sm:$0xff]
      %v1470 = vld [vmem:[%s1461 + $0x40] sm:$0xff]
      %v1471 = vld [vmem:[%s1461 + $0x48] sm:$0xff]
      %v1472 = vld [vmem:[%s1461 + $0x50] sm:$0xff]
      %v1473 = vld [vmem:[%s1461 + $0x58] sm:$0xff]
      %v1474 = vld [vmem:[%s1461 + $0x60] sm:$0xff]
      %v1475 = vld [vmem:[%s1461 + $0x68] sm:$0xff]
      %v1476 = vld [vmem:[%s1461 + $0x70] sm:$0xff]
      %v1477 = vld [vmem:[%s1461 + $0x78] sm:$0xff]
      %v1478 = vld [vmem:[%s1461 + $0x80] sm:$0xff]
      %v1479 = vld [vmem:[%s1461 + $0x88] sm:$0xff]
      %v1480 = vld [vmem:[%s1461 + $0x90] sm:$0xff]
      %v1481 = vld [vmem:[%s1461 + $0x98] sm:$0xff]
      %v1482 = vld [vmem:[%s1461 + $0xa0] sm:$0xff]
      %v1483 = vld [vmem:[%s1461 + $0xa8] sm:$0xff]
      %v1484 = vld [vmem:[%s1461 + $0xb0] sm:$0xff]
      %v1485 = vld [vmem:[%s1461 + $0xb8] sm:$0xff]
      %v1486 = vld [vmem:[%s1461 + $0xc0] sm:$0xff]
      %v1487 = vld [vmem:[%s1461 + $0xc8] sm:$0xff]
      %v1488 = vld [vmem:[%s1461 + $0xd0] sm:$0xff]
      %v1489 = vld [vmem:[%s1461 + $0xd8] sm:$0xff]
      %v1490 = vld [vmem:[%s1461 + $0xe0] sm:$0xff]
      %v1491 = vld [vmem:[%s1461 + $0xe8] sm:$0xff]
      %v1492 = vld [vmem:[%s1461 + $0xf0] sm:$0xff]
      %v1493 = vld [vmem:[%s1461 + $0xf8] sm:$0xff]
      %1494 = vrot.lane.b32.xlu0 %v273, 125
      %v1495 = vpop.permute.xlu0 %1494
      %1496 = vrot.lane.b32.xlu0 %v278, 125
      %v1497 = vpop.permute.xlu0 %1496
      %1498 = vrot.lane.b32.xlu0 %v283, 125
      %v1499 = vpop.permute.xlu0 %1498
      %1500 = vrot.lane.b32.xlu0 %v288, 125
      %v1501 = vpop.permute.xlu0 %1500
      %1502 = vrot.lane.b32.xlu0 %v293, 125
      %v1503 = vpop.permute.xlu0 %1502
      %1504 = vrot.lane.b32.xlu0 %v298, 125
      %v1505 = vpop.permute.xlu0 %1504
      %1506 = vrot.lane.b32.xlu0 %v303, 125
      %v1507 = vpop.permute.xlu0 %1506
      %1508 = vrot.lane.b32.xlu0 %v308, 125
      %v1509 = vpop.permute.xlu0 %1508
      %v1519 = vsel %vm408, %v1462, 0
      %v1522 = vsel %vm408, %v1463, 0
      %v1525 = vsel %vm408, %v1464, 0
      %v1528 = vsel %vm408, %v1465, 0
      %v1531 = vsel %vm408, %v1466, 0
      %v1534 = vsel %vm408, %v1467, 0
      %v1537 = vsel %vm408, %v1468, 0
      %v1540 = vsel %vm408, %v1469, 0
      %v1543 = vsel %vm408, %v1470, 0
      %v1546 = vsel %vm408, %v1471, 0
      %v1549 = vsel %vm408, %v1472, 0
      %v1552 = vsel %vm408, %v1473, 0
      %v1555 = vsel %vm408, %v1474, 0
      %v1558 = vsel %vm408, %v1475, 0
      %v1561 = vsel %vm408, %v1476, 0
      %v1564 = vsel %vm408, %v1477, 0
      %v1567 = vsel %vm408, %v1478, 0
      %v1570 = vsel %vm408, %v1479, 0
      %v1573 = vsel %vm408, %v1480, 0
      %v1576 = vsel %vm408, %v1481, 0
      %v1579 = vsel %vm408, %v1482, 0
      %v1582 = vsel %vm408, %v1483, 0
      %v1585 = vsel %vm408, %v1484, 0
      %v1588 = vsel %vm408, %v1485, 0
      %v1591 = vsel %vm408, %v1486, 0
      %v1594 = vsel %vm408, %v1487, 0
      %v1597 = vsel %vm408, %v1488, 0
      %v1600 = vsel %vm408, %v1489, 0
      %v1603 = vsel %vm408, %v1490, 0
      %v1606 = vsel %vm408, %v1491, 0
      %v1609 = vsel %vm408, %v1492, 0
      %v1612 = vsel %vm408, %v1493, 0
      %1614 = vmatprep.subr.mxu0 0.0
      %1615 = vmatpush1.msra.mxu0 %v1495
      %1616 = vmatprep.subr.mxu0 0.0
      %1617 = vmatpush1.msra.mxu0 %v1497
      %1618 = vmatprep.subr.mxu0 0.0
      %1619 = vmatpush1.msra.mxu0 %v1499
      %1620 = vmatprep.subr.mxu0 0.0
      %1621 = vmatpush1.msra.mxu0 %v1501
      %1622 = vmatprep.subr.mxu0 0.0
      %1623 = vmatpush1.msra.mxu0 %v1503
      %1624 = vmatprep.subr.mxu0 0.0
      %1625 = vmatpush1.msra.mxu0 %v1505
      %1626 = vmatprep.subr.mxu0 0.0
      %1627 = vmatpush1.msra.mxu0 %v1507
      %1628 = vmatprep.subr.mxu0 0.0
      %1629 = vmatpush1.msra.mxu0 %v1509
      %1630 = vmatprep.subr.mxu0 0.0
      %1631 = vmatpush1.msra.mxu0 0.0
      %1632 = vmatprep.subr.mxu0 0.0
      %1633 = vmatpush1.msra.mxu0 0.0
      %1634 = vmatprep.subr.mxu0 0.0
      %1635 = vmatpush1.msra.mxu0 0.0
      %1636 = vmatprep.subr.mxu0 0.0
      %1637 = vmatpush1.msra.mxu0 0.0
      %1638 = vmatprep.subr.mxu0 0.0
      %1639 = vmatpush1.msra.mxu0 0.0
      %1640 = vmatprep.subr.mxu0 0.0
      %1641 = vmatpush1.msra.mxu0 0.0
      %1642 = vmatprep.subr.mxu0 0.0
      %1643 = vmatpush1.msra.mxu0 0.0
      %1644 = vmatprep.subr.mxu0 0.0
      %1645 = vmatpush1.msra.mxu0 0.0
      %1646 = vmatprep.subr.mxu0 0.0
      %1647 = vmatpush1.msra.mxu0 0.0
      %1648 = vmatprep.subr.mxu0 0.0
      %1649 = vmatpush1.msra.mxu0 0.0
      %1650 = vmatprep.subr.mxu0 0.0
      %1651 = vmatpush1.msra.mxu0 0.0
      %1652 = vmatprep.subr.mxu0 0.0
      %1653 = vmatpush1.msra.mxu0 0.0
      %1654 = vmatprep.subr.mxu0 0.0
      %1655 = vmatpush1.msra.mxu0 0.0
      %1656 = vmatprep.subr.mxu0 0.0
      %1657 = vmatpush1.msra.mxu0 0.0
      %1658 = vmatprep.subr.mxu0 0.0
      %1659 = vmatpush1.msra.mxu0 0.0
      %1660 = vmatprep.subr.mxu0 0.0
      %1661 = vmatpush1.msra.mxu0 0.0
      %1662 = vmatprep.subr.mxu0 0.0
      %1663 = vmatpush1.msra.mxu0 0.0
      %1664 = vmatprep.subr.mxu0 0.0
      %1665 = vmatpush1.msra.mxu0 0.0
      %1666 = vmatprep.subr.mxu0 0.0
      %1667 = vmatpush1.msra.mxu0 0.0
      %1668 = vmatprep.subr.mxu0 0.0
      %1669 = vmatpush1.msra.mxu0 0.0
      %1670 = vmatprep.subr.mxu0 0.0
      %1671 = vmatpush1.msra.mxu0 0.0
      %1672 = vmatprep.subr.mxu0 0.0
      %1673 = vmatpush1.msra.mxu0 0.0
      %1674 = vmatprep.subr.mxu0 0.0
      %1675 = vmatpush1.msra.mxu0 0.0
      %1676 = vmatprep.subr.mxu0 0.0
      %1677 = vmatpush1.msra.mxu0 0.0
      %1678 = vmatprep.mubr.f32.mxu0 0.0
      %1679 = vmatmul.mubr.f32.gmra.mrb[0].mxu0 %v1519
      %v1680 = vpop.f32.mrb[0].mxu0
      %v1681 = vadd.f32 0.0, %v1680
      %v1682 = vpop.f32.mrb[0].mxu0
      %1683 = vmatprep.mubr.f32.mxu0 0.0
      %1684 = vmatmul.mubr.f32.gmra.mrb[0].mxu0 %v1522
      %v1685 = vpop.f32.mrb[0].mxu0
      %v1686 = vadd.f32 0.0, %v1685
      %v1687 = vpop.f32.mrb[0].mxu0
      %1688 = vmatprep.mubr.f32.mxu0 0.0
      %1689 = vmatmul.mubr.f32.gmra.mrb[0].mxu0 %v1525
      %v1690 = vpop.f32.mrb[0].mxu0
      %v1691 = vadd.f32 0.0, %v1690
      %v1692 = vpop.f32.mrb[0].mxu0
      %1693 = vmatprep.mubr.f32.mxu0 0.0
      %1694 = vmatmul.mubr.f32.gmra.mrb[0].mxu0 %v1528
      %v1695 = vpop.f32.mrb[0].mxu0
      %v1696 = vadd.f32 0.0, %v1695
      %v1697 = vpop.f32.mrb[0].mxu0
      %1698 = vmatprep.mubr.f32.mxu0 0.0
      %1699 = vmatmul.mubr.f32.gmra.mrb[0].mxu0 %v1531
      %v1700 = vpop.f32.mrb[0].mxu0
      %v1701 = vadd.f32 0.0, %v1700
      %v1702 = vpop.f32.mrb[0].mxu0
      %1703 = vmatprep.mubr.f32.mxu0 0.0
      %1704 = vmatmul.mubr.f32.gmra.mrb[0].mxu0 %v1534
      %v1705 = vpop.f32.mrb[0].mxu0
      %v1706 = vadd.f32 0.0, %v1705
      %v1707 = vpop.f32.mrb[0].mxu0
      %1708 = vmatprep.mubr.f32.mxu0 0.0
      %1709 = vmatmul.mubr.f32.gmra.mrb[0].mxu0 %v1537
      %v1710 = vpop.f32.mrb[0].mxu0
      %v1711 = vadd.f32 0.0, %v1710
      %v1712 = vpop.f32.mrb[0].mxu0
      %1713 = vmatprep.mubr.f32.mxu0 0.0
      %1714 = vmatmul.mubr.f32.gmra.mrb[0].mxu0 %v1540
      %v1715 = vpop.f32.mrb[0].mxu0
      %v1716 = vadd.f32 0.0, %v1715
      %v1717 = vpop.f32.mrb[0].mxu0
      %1718 = vmatprep.mubr.f32.mxu0 0.0
      %1719 = vmatmul.mubr.f32.gmra.mrb[0].mxu0 %v1543
      %v1720 = vpop.f32.mrb[0].mxu0
      %v1721 = vadd.f32 0.0, %v1720
      %v1722 = vpop.f32.mrb[0].mxu0
      %1723 = vmatprep.mubr.f32.mxu0 0.0
      %1724 = vmatmul.mubr.f32.gmra.mrb[0].mxu0 %v1546
      %v1725 = vpop.f32.mrb[0].mxu0
      %v1726 = vadd.f32 0.0, %v1725
      %v1727 = vpop.f32.mrb[0].mxu0
      %1728 = vmatprep.mubr.f32.mxu0 0.0
      %1729 = vmatmul.mubr.f32.gmra.mrb[0].mxu0 %v1549
      %v1730 = vpop.f32.mrb[0].mxu0
      %v1731 = vadd.f32 0.0, %v1730
      %v1732 = vpop.f32.mrb[0].mxu0
      %1733 = vmatprep.mubr.f32.mxu0 0.0
      %1734 = vmatmul.mubr.f32.gmra.mrb[0].mxu0 %v1552
      %v1735 = vpop.f32.mrb[0].mxu0
      %v1736 = vadd.f32 0.0, %v1735
      %v1737 = vpop.f32.mrb[0].mxu0
      %1738 = vmatprep.mubr.f32.mxu0 0.0
      %1739 = vmatmul.mubr.f32.gmra.mrb[0].mxu0 %v1555
      %v1740 = vpop.f32.mrb[0].mxu0
      %v1741 = vadd.f32 0.0, %v1740
      %v1742 = vpop.f32.mrb[0].mxu0
      %1743 = vmatprep.mubr.f32.mxu0 0.0
      %1744 = vmatmul.mubr.f32.gmra.mrb[0].mxu0 %v1558
      %v1745 = vpop.f32.mrb[0].mxu0
      %v1746 = vadd.f32 0.0, %v1745
      %v1747 = vpop.f32.mrb[0].mxu0
      %1748 = vmatprep.mubr.f32.mxu0 0.0
      %1749 = vmatmul.mubr.f32.gmra.mrb[0].mxu0 %v1561
      %v1750 = vpop.f32.mrb[0].mxu0
      %v1751 = vadd.f32 0.0, %v1750
      %v1752 = vpop.f32.mrb[0].mxu0
      %1753 = vmatprep.mubr.f32.mxu0 0.0
      %1754 = vmatmul.mubr.f32.gmra.mrb[0].mxu0 %v1564
      %v1755 = vpop.f32.mrb[0].mxu0
      %v1756 = vadd.f32 0.0, %v1755
      %v1757 = vpop.f32.mrb[0].mxu0
      %1758 = vmatprep.mubr.f32.mxu0 0.0
      %1759 = vmatmul.mubr.f32.gmra.mrb[0].mxu0 %v1567
      %v1760 = vpop.f32.mrb[0].mxu0
      %v1761 = vadd.f32 0.0, %v1760
      %v1762 = vpop.f32.mrb[0].mxu0
      %1763 = vmatprep.mubr.f32.mxu0 0.0
      %1764 = vmatmul.mubr.f32.gmra.mrb[0].mxu0 %v1570
      %v1765 = vpop.f32.mrb[0].mxu0
      %v1766 = vadd.f32 0.0, %v1765
      %v1767 = vpop.f32.mrb[0].mxu0
      %1768 = vmatprep.mubr.f32.mxu0 0.0
      %1769 = vmatmul.mubr.f32.gmra.mrb[0].mxu0 %v1573
      %v1770 = vpop.f32.mrb[0].mxu0
      %v1771 = vadd.f32 0.0, %v1770
      %v1772 = vpop.f32.mrb[0].mxu0
      %1773 = vmatprep.mubr.f32.mxu0 0.0
      %1774 = vmatmul.mubr.f32.gmra.mrb[0].mxu0 %v1576
      %v1775 = vpop.f32.mrb[0].mxu0
      %v1776 = vadd.f32 0.0, %v1775
      %v1777 = vpop.f32.mrb[0].mxu0
      %1778 = vmatprep.mubr.f32.mxu0 0.0
      %1779 = vmatmul.mubr.f32.gmra.mrb[0].mxu0 %v1579
      %v1780 = vpop.f32.mrb[0].mxu0
      %v1781 = vadd.f32 0.0, %v1780
      %v1782 = vpop.f32.mrb[0].mxu0
      %1783 = vmatprep.mubr.f32.mxu0 0.0
      %1784 = vmatmul.mubr.f32.gmra.mrb[0].mxu0 %v1582
      %v1785 = vpop.f32.mrb[0].mxu0
      %v1786 = vadd.f32 0.0, %v1785
      %v1787 = vpop.f32.mrb[0].mxu0
      %1788 = vmatprep.mubr.f32.mxu0 0.0
      %1789 = vmatmul.mubr.f32.gmra.mrb[0].mxu0 %v1585
      %v1790 = vpop.f32.mrb[0].mxu0
      %v1791 = vadd.f32 0.0, %v1790
      %v1792 = vpop.f32.mrb[0].mxu0
      %1793 = vmatprep.mubr.f32.mxu0 0.0
      %1794 = vmatmul.mubr.f32.gmra.mrb[0].mxu0 %v1588
      %v1795 = vpop.f32.mrb[0].mxu0
      %v1796 = vadd.f32 0.0, %v1795
      %v1797 = vpop.f32.mrb[0].mxu0
      %1798 = vmatprep.mubr.f32.mxu0 0.0
      %1799 = vmatmul.mubr.f32.gmra.mrb[0].mxu0 %v1591
      %v1800 = vpop.f32.mrb[0].mxu0
      %v1801 = vadd.f32 0.0, %v1800
      %v1802 = vpop.f32.mrb[0].mxu0
      %1803 = vmatprep.mubr.f32.mxu0 0.0
      %1804 = vmatmul.mubr.f32.gmra.mrb[0].mxu0 %v1594
      %v1805 = vpop.f32.mrb[0].mxu0
      %v1806 = vadd.f32 0.0, %v1805
      %v1807 = vpop.f32.mrb[0].mxu0
      %1808 = vmatprep.mubr.f32.mxu0 0.0
      %1809 = vmatmul.mubr.f32.gmra.mrb[0].mxu0 %v1597
      %v1810 = vpop.f32.mrb[0].mxu0
      %v1811 = vadd.f32 0.0, %v1810
      %v1812 = vpop.f32.mrb[0].mxu0
      %1813 = vmatprep.mubr.f32.mxu0 0.0
      %1814 = vmatmul.mubr.f32.gmra.mrb[0].mxu0 %v1600
      %v1815 = vpop.f32.mrb[0].mxu0
      %v1816 = vadd.f32 0.0, %v1815
      %v1817 = vpop.f32.mrb[0].mxu0
      %1818 = vmatprep.mubr.f32.mxu0 0.0
      %1819 = vmatmul.mubr.f32.gmra.mrb[0].mxu0 %v1603
      %v1820 = vpop.f32.mrb[0].mxu0
      %v1821 = vadd.f32 0.0, %v1820
      %v1822 = vpop.f32.mrb[0].mxu0
      %1823 = vmatprep.mubr.f32.mxu0 0.0
      %1824 = vmatmul.mubr.f32.gmra.mrb[0].mxu0 %v1606
      %v1825 = vpop.f32.mrb[0].mxu0
      %v1826 = vadd.f32 0.0, %v1825
      %v1827 = vpop.f32.mrb[0].mxu0
      %1828 = vmatprep.mubr.f32.mxu0 0.0
      %1829 = vmatmul.mubr.f32.gmra.mrb[0].mxu0 %v1609
      %v1830 = vpop.f32.mrb[0].mxu0
      %v1831 = vadd.f32 0.0, %v1830
      %v1832 = vpop.f32.mrb[0].mxu0
      %1833 = vmatprep.mubr.f32.mxu0 0.0
      %1834 = vmatmul.mubr.f32.gmra.mrb[0].mxu0 %v1612
      %v1835 = vpop.f32.mrb[0].mxu0
      %v1836 = vadd.f32 0.0, %v1835
      %v1837 = vpop.f32.mrb[0].mxu0
      %1838 = vdwg.mxu0
      %v1839 = vadd.f32 %v1429, %v1681
      %v1840 = vadd.f32 %v1430, %v1686
      %v1841 = vadd.f32 %v1431, %v1691
      %v1842 = vadd.f32 %v1432, %v1696
      %v1843 = vadd.f32 %v1433, %v1701
      %v1844 = vadd.f32 %v1434, %v1706
      %v1845 = vadd.f32 %v1435, %v1711
      %v1846 = vadd.f32 %v1436, %v1716
      %v1847 = vadd.f32 %v1437, %v1721
      %v1848 = vadd.f32 %v1438, %v1726
      %v1849 = vadd.f32 %v1439, %v1731
      %v1850 = vadd.f32 %v1440, %v1736
      %v1851 = vadd.f32 %v1441, %v1741
      %v1852 = vadd.f32 %v1442, %v1746
      %v1853 = vadd.f32 %v1443, %v1751
      %v1854 = vadd.f32 %v1444, %v1756
      %v1855 = vadd.f32 %v1445, %v1761
      %v1856 = vadd.f32 %v1446, %v1766
      %v1857 = vadd.f32 %v1447, %v1771
      %v1858 = vadd.f32 %v1448, %v1776
      %v1859 = vadd.f32 %v1449, %v1781
      %v1860 = vadd.f32 %v1450, %v1786
      %v1861 = vadd.f32 %v1451, %v1791
      %v1862 = vadd.f32 %v1452, %v1796
      %v1863 = vadd.f32 %v1453, %v1801
      %v1864 = vadd.f32 %v1454, %v1806
      %v1865 = vadd.f32 %v1455, %v1811
      %v1866 = vadd.f32 %v1456, %v1816
      %v1867 = vadd.f32 %v1457, %v1821
      %v1868 = vadd.f32 %v1458, %v1826
      %v1869 = vadd.f32 %v1459, %v1831
      %v1870 = vadd.f32 %v1460, %v1836
      %s1871 = scalar_lea.vmem %s2, 1024
      %v1872 = vld [vmem:[%s1871] sm:$0xff]
      %v1873 = vld [vmem:[%s1871 + $0x8] sm:$0xff]
      %v1874 = vld [vmem:[%s1871 + $0x10] sm:$0xff]
      %v1875 = vld [vmem:[%s1871 + $0x18] sm:$0xff]
      %v1876 = vld [vmem:[%s1871 + $0x20] sm:$0xff]
      %v1877 = vld [vmem:[%s1871 + $0x28] sm:$0xff]
      %v1878 = vld [vmem:[%s1871 + $0x30] sm:$0xff]
      %v1879 = vld [vmem:[%s1871 + $0x38] sm:$0xff]
      %v1880 = vld [vmem:[%s1871 + $0x40] sm:$0xff]
      %v1881 = vld [vmem:[%s1871 + $0x48] sm:$0xff]
      %v1882 = vld [vmem:[%s1871 + $0x50] sm:$0xff]
      %v1883 = vld [vmem:[%s1871 + $0x58] sm:$0xff]
      %v1884 = vld [vmem:[%s1871 + $0x60] sm:$0xff]
      %v1885 = vld [vmem:[%s1871 + $0x68] sm:$0xff]
      %v1886 = vld [vmem:[%s1871 + $0x70] sm:$0xff]
      %v1887 = vld [vmem:[%s1871 + $0x78] sm:$0xff]
      %v1888 = vld [vmem:[%s1871 + $0x80] sm:$0xff]
      %v1889 = vld [vmem:[%s1871 + $0x88] sm:$0xff]
      %v1890 = vld [vmem:[%s1871 + $0x90] sm:$0xff]
      %v1891 = vld [vmem:[%s1871 + $0x98] sm:$0xff]
      %v1892 = vld [vmem:[%s1871 + $0xa0] sm:$0xff]
      %v1893 = vld [vmem:[%s1871 + $0xa8] sm:$0xff]
      %v1894 = vld [vmem:[%s1871 + $0xb0] sm:$0xff]
      %v1895 = vld [vmem:[%s1871 + $0xb8] sm:$0xff]
      %v1896 = vld [vmem:[%s1871 + $0xc0] sm:$0xff]
      %v1897 = vld [vmem:[%s1871 + $0xc8] sm:$0xff]
      %v1898 = vld [vmem:[%s1871 + $0xd0] sm:$0xff]
      %v1899 = vld [vmem:[%s1871 + $0xd8] sm:$0xff]
      %v1900 = vld [vmem:[%s1871 + $0xe0] sm:$0xff]
      %v1901 = vld [vmem:[%s1871 + $0xe8] sm:$0xff]
      %v1902 = vld [vmem:[%s1871 + $0xf0] sm:$0xff]
      %v1903 = vld [vmem:[%s1871 + $0xf8] sm:$0xff]
      %1904 = vrot.lane.b32.xlu0 %v273, 124
      %v1905 = vpop.permute.xlu0 %1904
      %1906 = vrot.lane.b32.xlu0 %v278, 124
      %v1907 = vpop.permute.xlu0 %1906
      %1908 = vrot.lane.b32.xlu0 %v283, 124
      %v1909 = vpop.permute.xlu0 %1908
      %1910 = vrot.lane.b32.xlu0 %v288, 124
      %v1911 = vpop.permute.xlu0 %1910
      %1912 = vrot.lane.b32.xlu0 %v293, 124
      %v1913 = vpop.permute.xlu0 %1912
      %1914 = vrot.lane.b32.xlu0 %v298, 124
      %v1915 = vpop.permute.xlu0 %1914
      %1916 = vrot.lane.b32.xlu0 %v303, 124
      %v1917 = vpop.permute.xlu0 %1916
      %1918 = vrot.lane.b32.xlu0 %v308, 124
      %v1919 = vpop.permute.xlu0 %1918
      %v1929 = vsel %vm408, %v1872, 0
      %v1932 = vsel %vm408, %v1873, 0
      %v1935 = vsel %vm408, %v1874, 0
      %v1938 = vsel %vm408, %v1875, 0
      %v1941 = vsel %vm408, %v1876, 0
      %v1944 = vsel %vm408, %v1877, 0
      %v1947 = vsel %vm408, %v1878, 0
      %v1950 = vsel %vm408, %v1879, 0
      %v1953 = vsel %vm408, %v1880, 0
      %v1956 = vsel %vm408, %v1881, 0
      %v1959 = vsel %vm408, %v1882, 0
      %v1962 = vsel %vm408, %v1883, 0
      %v1965 = vsel %vm408, %v1884, 0
      %v1968 = vsel %vm408, %v1885, 0
      %v1971 = vsel %vm408, %v1886, 0
      %v1974 = vsel %vm408, %v1887, 0
      %v1977 = vsel %vm408, %v1888, 0
      %v1980 = vsel %vm408, %v1889, 0
      %v1983 = vsel %vm408, %v1890, 0
      %v1986 = vsel %vm408, %v1891, 0
      %v1989 = vsel %vm408, %v1892, 0
      %v1992 = vsel %vm408, %v1893, 0
      %v1995 = vsel %vm408, %v1894, 0
      %v1998 = vsel %vm408, %v1895, 0
      %v2001 = vsel %vm408, %v1896, 0
      %v2004 = vsel %vm408, %v1897, 0
      %v2007 = vsel %vm408, %v1898, 0
      %v2010 = vsel %vm408, %v1899, 0
      %v2013 = vsel %vm408, %v1900, 0
      %v2016 = vsel %vm408, %v1901, 0
      %v2019 = vsel %vm408, %v1902, 0
      %v2022 = vsel %vm408, %v1903, 0
      %2024 = vmatprep.subr.mxu0 0.0
      %2025 = vmatpush1.msra.mxu0 %v1905
      %2026 = vmatprep.subr.mxu0 0.0
      %2027 = vmatpush1.msra.mxu0 %v1907
      %2028 = vmatprep.subr.mxu0 0.0
      %2029 = vmatpush1.msra.mxu0 %v1909
      %2030 = vmatprep.subr.mxu0 0.0
      %2031 = vmatpush1.msra.mxu0 %v1911
      %2032 = vmatprep.subr.mxu0 0.0
      %2033 = vmatpush1.msra.mxu0 %v1913
      %2034 = vmatprep.subr.mxu0 0.0
      %2035 = vmatpush1.msra.mxu0 %v1915
      %2036 = vmatprep.subr.mxu0 0.0
      %2037 = vmatpush1.msra.mxu0 %v1917
      %2038 = vmatprep.subr.mxu0 0.0
      %2039 = vmatpush1.msra.mxu0 %v1919
      %2040 = vmatprep.subr.mxu0 0.0
      %2041 = vmatpush1.msra.mxu0 0.0
      %2042 = vmatprep.subr.mxu0 0.0
      %2043 = vmatpush1.msra.mxu0 0.0
      %2044 = vmatprep.subr.mxu0 0.0
      %2045 = vmatpush1.msra.mxu0 0.0
      %2046 = vmatprep.subr.mxu0 0.0
      %2047 = vmatpush1.msra.mxu0 0.0
      %2048 = vmatprep.subr.mxu0 0.0
      %2049 = vmatpush1.msra.mxu0 0.0
      %2050 = vmatprep.subr.mxu0 0.0
      %2051 = vmatpush1.msra.mxu0 0.0
      %2052 = vmatprep.subr.mxu0 0.0
      %2053 = vmatpush1.msra.mxu0 0.0
      %2054 = vmatprep.subr.mxu0 0.0
      %2055 = vmatpush1.msra.mxu0 0.0
      %2056 = vmatprep.subr.mxu0 0.0
      %2057 = vmatpush1.msra.mxu0 0.0
      %2058 = vmatprep.subr.mxu0 0.0
      %2059 = vmatpush1.msra.mxu0 0.0
      %2060 = vmatprep.subr.mxu0 0.0
      %2061 = vmatpush1.msra.mxu0 0.0
      %2062 = vmatprep.subr.mxu0 0.0
      %2063 = vmatpush1.msra.mxu0 0.0
      %2064 = vmatprep.subr.mxu0 0.0
      %2065 = vmatpush1.msra.mxu0 0.0
      %2066 = vmatprep.subr.mxu0 0.0
      %2067 = vmatpush1.msra.mxu0 0.0
      %2068 = vmatprep.subr.mxu0 0.0
      %2069 = vmatpush1.msra.mxu0 0.0
      %2070 = vmatprep.subr.mxu0 0.0
      %2071 = vmatpush1.msra.mxu0 0.0
      %2072 = vmatprep.subr.mxu0 0.0
      %2073 = vmatpush1.msra.mxu0 0.0
      %2074 = vmatprep.subr.mxu0 0.0
      %2075 = vmatpush1.msra.mxu0 0.0
      %2076 = vmatprep.subr.mxu0 0.0
      %2077 = vmatpush1.msra.mxu0 0.0
      %2078 = vmatprep.subr.mxu0 0.0
      %2079 = vmatpush1.msra.mxu0 0.0
      %2080 = vmatprep.subr.mxu0 0.0
      %2081 = vmatpush1.msra.mxu0 0.0
      %2082 = vmatprep.subr.mxu0 0.0
      %2083 = vmatpush1.msra.mxu0 0.0
      %2084 = vmatprep.subr.mxu0 0.0
      %2085 = vmatpush1.msra.mxu0 0.0
      %2086 = vmatprep.subr.mxu0 0.0
      %2087 = vmatpush1.msra.mxu0 0.0
      %2088 = vmatprep.mubr.f32.mxu0 0.0
      %2089 = vmatmul.mubr.f32.gmra.mrb[0].mxu0 %v1929
      %v2090 = vpop.f32.mrb[0].mxu0
      %v2091 = vadd.f32 0.0, %v2090
      %v2092 = vpop.f32.mrb[0].mxu0
      %2093 = vmatprep.mubr.f32.mxu0 0.0
      %2094 = vmatmul.mubr.f32.gmra.mrb[0].mxu0 %v1932
      %v2095 = vpop.f32.mrb[0].mxu0
      %v2096 = vadd.f32 0.0, %v2095
      %v2097 = vpop.f32.mrb[0].mxu0
      %2098 = vmatprep.mubr.f32.mxu0 0.0
      %2099 = vmatmul.mubr.f32.gmra.mrb[0].mxu0 %v1935
      %v2100 = vpop.f32.mrb[0].mxu0
      %v2101 = vadd.f32 0.0, %v2100
      %v2102 = vpop.f32.mrb[0].mxu0
      %2103 = vmatprep.mubr.f32.mxu0 0.0
      %2104 = vmatmul.mubr.f32.gmra.mrb[0].mxu0 %v1938
      %v2105 = vpop.f32.mrb[0].mxu0
      %v2106 = vadd.f32 0.0, %v2105
      %v2107 = vpop.f32.mrb[0].mxu0
      %2108 = vmatprep.mubr.f32.mxu0 0.0
      %2109 = vmatmul.mubr.f32.gmra.mrb[0].mxu0 %v1941
      %v2110 = vpop.f32.mrb[0].mxu0
      %v2111 = vadd.f32 0.0, %v2110
      %v2112 = vpop.f32.mrb[0].mxu0
      %2113 = vmatprep.mubr.f32.mxu0 0.0
      %2114 = vmatmul.mubr.f32.gmra.mrb[0].mxu0 %v1944
      %v2115 = vpop.f32.mrb[0].mxu0
      %v2116 = vadd.f32 0.0, %v2115
      %v2117 = vpop.f32.mrb[0].mxu0
      %2118 = vmatprep.mubr.f32.mxu0 0.0
      %2119 = vmatmul.mubr.f32.gmra.mrb[0].mxu0 %v1947
      %v2120 = vpop.f32.mrb[0].mxu0
      %v2121 = vadd.f32 0.0, %v2120
      %v2122 = vpop.f32.mrb[0].mxu0
      %2123 = vmatprep.mubr.f32.mxu0 0.0
      %2124 = vmatmul.mubr.f32.gmra.mrb[0].mxu0 %v1950
      %v2125 = vpop.f32.mrb[0].mxu0
      %v2126 = vadd.f32 0.0, %v2125
      %v2127 = vpop.f32.mrb[0].mxu0
      %2128 = vmatprep.mubr.f32.mxu0 0.0
      %2129 = vmatmul.mubr.f32.gmra.mrb[0].mxu0 %v1953
      %v2130 = vpop.f32.mrb[0].mxu0
      %v2131 = vadd.f32 0.0, %v2130
      %v2132 = vpop.f32.mrb[0].mxu0
      %2133 = vmatprep.mubr.f32.mxu0 0.0
      %2134 = vmatmul.mubr.f32.gmra.mrb[0].mxu0 %v1956
      %v2135 = vpop.f32.mrb[0].mxu0
      %v2136 = vadd.f32 0.0, %v2135
      %v2137 = vpop.f32.mrb[0].mxu0
      %2138 = vmatprep.mubr.f32.mxu0 0.0
      %2139 = vmatmul.mubr.f32.gmra.mrb[0].mxu0 %v1959
      %v2140 = vpop.f32.mrb[0].mxu0
      %v2141 = vadd.f32 0.0, %v2140
      %v2142 = vpop.f32.mrb[0].mxu0
      %2143 = vmatprep.mubr.f32.mxu0 0.0
      %2144 = vmatmul.mubr.f32.gmra.mrb[0].mxu0 %v1962
      %v2145 = vpop.f32.mrb[0].mxu0
      %v2146 = vadd.f32 0.0, %v2145
      %v2147 = vpop.f32.mrb[0].mxu0
      %2148 = vmatprep.mubr.f32.mxu0 0.0
      %2149 = vmatmul.mubr.f32.gmra.mrb[0].mxu0 %v1965
      %v2150 = vpop.f32.mrb[0].mxu0
      %v2151 = vadd.f32 0.0, %v2150
      %v2152 = vpop.f32.mrb[0].mxu0
      %2153 = vmatprep.mubr.f32.mxu0 0.0
      %2154 = vmatmul.mubr.f32.gmra.mrb[0].mxu0 %v1968
      %v2155 = vpop.f32.mrb[0].mxu0
      %v2156 = vadd.f32 0.0, %v2155
      %v2157 = vpop.f32.mrb[0].mxu0
      %2158 = vmatprep.mubr.f32.mxu0 0.0
      %2159 = vmatmul.mubr.f32.gmra.mrb[0].mxu0 %v1971
      %v2160 = vpop.f32.mrb[0].mxu0
      %v2161 = vadd.f32 0.0, %v2160
      %v2162 = vpop.f32.mrb[0].mxu0
      %2163 = vmatprep.mubr.f32.mxu0 0.0
      %2164 = vmatmul.mubr.f32.gmra.mrb[0].mxu0 %v1974
      %v2165 = vpop.f32.mrb[0].mxu0
      %v2166 = vadd.f32 0.0, %v2165
      %v2167 = vpop.f32.mrb[0].mxu0
      %2168 = vmatprep.mubr.f32.mxu0 0.0
      %2169 = vmatmul.mubr.f32.gmra.mrb[0].mxu0 %v1977
      %v2170 = vpop.f32.mrb[0].mxu0
      %v2171 = vadd.f32 0.0, %v2170
      %v2172 = vpop.f32.mrb[0].mxu0
      %2173 = vmatprep.mubr.f32.mxu0 0.0
      %2174 = vmatmul.mubr.f32.gmra.mrb[0].mxu0 %v1980
      %v2175 = vpop.f32.mrb[0].mxu0
      %v2176 = vadd.f32 0.0, %v2175
      %v2177 = vpop.f32.mrb[0].mxu0
      %2178 = vmatprep.mubr.f32.mxu0 0.0
      %2179 = vmatmul.mubr.f32.gmra.mrb[0].mxu0 %v1983
      %v2180 = vpop.f32.mrb[0].mxu0
      %v2181 = vadd.f32 0.0, %v2180
      %v2182 = vpop.f32.mrb[0].mxu0
      %2183 = vmatprep.mubr.f32.mxu0 0.0
      %2184 = vmatmul.mubr.f32.gmra.mrb[0].mxu0 %v1986
      %v2185 = vpop.f32.mrb[0].mxu0
      %v2186 = vadd.f32 0.0, %v2185
      %v2187 = vpop.f32.mrb[0].mxu0
      %2188 = vmatprep.mubr.f32.mxu0 0.0
      %2189 = vmatmul.mubr.f32.gmra.mrb[0].mxu0 %v1989
      %v2190 = vpop.f32.mrb[0].mxu0
      %v2191 = vadd.f32 0.0, %v2190
      %v2192 = vpop.f32.mrb[0].mxu0
      %2193 = vmatprep.mubr.f32.mxu0 0.0
      %2194 = vmatmul.mubr.f32.gmra.mrb[0].mxu0 %v1992
      %v2195 = vpop.f32.mrb[0].mxu0
      %v2196 = vadd.f32 0.0, %v2195
      %v2197 = vpop.f32.mrb[0].mxu0
      %2198 = vmatprep.mubr.f32.mxu0 0.0
      %2199 = vmatmul.mubr.f32.gmra.mrb[0].mxu0 %v1995
      %v2200 = vpop.f32.mrb[0].mxu0
      %v2201 = vadd.f32 0.0, %v2200
      %v2202 = vpop.f32.mrb[0].mxu0
      %2203 = vmatprep.mubr.f32.mxu0 0.0
      %2204 = vmatmul.mubr.f32.gmra.mrb[0].mxu0 %v1998
      %v2205 = vpop.f32.mrb[0].mxu0
      %v2206 = vadd.f32 0.0, %v2205
      %v2207 = vpop.f32.mrb[0].mxu0
      %2208 = vmatprep.mubr.f32.mxu0 0.0
      %2209 = vmatmul.mubr.f32.gmra.mrb[0].mxu0 %v2001
      %v2210 = vpop.f32.mrb[0].mxu0
      %v2211 = vadd.f32 0.0, %v2210
      %v2212 = vpop.f32.mrb[0].mxu0
      %2213 = vmatprep.mubr.f32.mxu0 0.0
      %2214 = vmatmul.mubr.f32.gmra.mrb[0].mxu0 %v2004
      %v2215 = vpop.f32.mrb[0].mxu0
      %v2216 = vadd.f32 0.0, %v2215
      %v2217 = vpop.f32.mrb[0].mxu0
      %2218 = vmatprep.mubr.f32.mxu0 0.0
      %2219 = vmatmul.mubr.f32.gmra.mrb[0].mxu0 %v2007
      %v2220 = vpop.f32.mrb[0].mxu0
      %v2221 = vadd.f32 0.0, %v2220
      %v2222 = vpop.f32.mrb[0].mxu0
      %2223 = vmatprep.mubr.f32.mxu0 0.0
      %2224 = vmatmul.mubr.f32.gmra.mrb[0].mxu0 %v2010
      %v2225 = vpop.f32.mrb[0].mxu0
      %v2226 = vadd.f32 0.0, %v2225
      %v2227 = vpop.f32.mrb[0].mxu0
      %2228 = vmatprep.mubr.f32.mxu0 0.0
      %2229 = vmatmul.mubr.f32.gmra.mrb[0].mxu0 %v2013
      %v2230 = vpop.f32.mrb[0].mxu0
      %v2231 = vadd.f32 0.0, %v2230
      %v2232 = vpop.f32.mrb[0].mxu0
      %2233 = vmatprep.mubr.f32.mxu0 0.0
      %2234 = vmatmul.mubr.f32.gmra.mrb[0].mxu0 %v2016
      %v2235 = vpop.f32.mrb[0].mxu0
      %v2236 = vadd.f32 0.0, %v2235
      %v2237 = vpop.f32.mrb[0].mxu0
      %2238 = vmatprep.mubr.f32.mxu0 0.0
      %2239 = vmatmul.mubr.f32.gmra.mrb[0].mxu0 %v2019
      %v2240 = vpop.f32.mrb[0].mxu0
      %v2241 = vadd.f32 0.0, %v2240
      %v2242 = vpop.f32.mrb[0].mxu0
      %2243 = vmatprep.mubr.f32.mxu0 0.0
      %2244 = vmatmul.mubr.f32.gmra.mrb[0].mxu0 %v2022
      %v2245 = vpop.f32.mrb[0].mxu0
      %v2246 = vadd.f32 0.0, %v2245
      %v2247 = vpop.f32.mrb[0].mxu0
      %2248 = vdwg.mxu0
      %v2249 = vadd.f32 %v1839, %v2091
      %v2250 = vadd.f32 %v1840, %v2096
      %v2251 = vadd.f32 %v1841, %v2101
      %v2252 = vadd.f32 %v1842, %v2106
      %v2253 = vadd.f32 %v1843, %v2111
      %v2254 = vadd.f32 %v1844, %v2116
      %v2255 = vadd.f32 %v1845, %v2121
      %v2256 = vadd.f32 %v1846, %v2126
      %v2257 = vadd.f32 %v1847, %v2131
      %v2258 = vadd.f32 %v1848, %v2136
      %v2259 = vadd.f32 %v1849, %v2141
      %v2260 = vadd.f32 %v1850, %v2146
      %v2261 = vadd.f32 %v1851, %v2151
      %v2262 = vadd.f32 %v1852, %v2156
      %v2263 = vadd.f32 %v1853, %v2161
      %v2264 = vadd.f32 %v1854, %v2166
      %v2265 = vadd.f32 %v1855, %v2171
      %v2266 = vadd.f32 %v1856, %v2176
      %v2267 = vadd.f32 %v1857, %v2181
      %v2268 = vadd.f32 %v1858, %v2186
      %v2269 = vadd.f32 %v1859, %v2191
      %v2270 = vadd.f32 %v1860, %v2196
      %v2271 = vadd.f32 %v1861, %v2201
      %v2272 = vadd.f32 %v1862, %v2206
      %v2273 = vadd.f32 %v1863, %v2211
      %v2274 = vadd.f32 %v1864, %v2216
      %v2275 = vadd.f32 %v1865, %v2221
      %v2276 = vadd.f32 %v1866, %v2226
      %v2277 = vadd.f32 %v1867, %v2231
      %v2278 = vadd.f32 %v1868, %v2236
      %v2279 = vadd.f32 %v1869, %v2241
      %v2280 = vadd.f32 %v1870, %v2246
      %vm2281 = vcmp.ge.f32.partialorder %v2249, 0.0
      %vm2282 = vcmp.ge.f32.partialorder %v2250, 0.0
      %vm2283 = vcmp.ge.f32.partialorder %v2251, 0.0
      %vm2284 = vcmp.ge.f32.partialorder %v2252, 0.0
      %vm2285 = vcmp.ge.f32.partialorder %v2253, 0.0
      %vm2286 = vcmp.ge.f32.partialorder %v2254, 0.0
      %vm2287 = vcmp.ge.f32.partialorder %v2255, 0.0
      %vm2288 = vcmp.ge.f32.partialorder %v2256, 0.0
      %vm2289 = vcmp.ge.f32.partialorder %v2257, 0.0
      %vm2290 = vcmp.ge.f32.partialorder %v2258, 0.0
      %vm2291 = vcmp.ge.f32.partialorder %v2259, 0.0
      %vm2292 = vcmp.ge.f32.partialorder %v2260, 0.0
      %vm2293 = vcmp.ge.f32.partialorder %v2261, 0.0
      %vm2294 = vcmp.ge.f32.partialorder %v2262, 0.0
      %vm2295 = vcmp.ge.f32.partialorder %v2263, 0.0
      %vm2296 = vcmp.ge.f32.partialorder %v2264, 0.0
      %vm2297 = vcmp.ge.f32.partialorder %v2265, 0.0
      %vm2298 = vcmp.ge.f32.partialorder %v2266, 0.0
      %vm2299 = vcmp.ge.f32.partialorder %v2267, 0.0
      %vm2300 = vcmp.ge.f32.partialorder %v2268, 0.0
      %vm2301 = vcmp.ge.f32.partialorder %v2269, 0.0
      %vm2302 = vcmp.ge.f32.partialorder %v2270, 0.0
      %vm2303 = vcmp.ge.f32.partialorder %v2271, 0.0
      %vm2304 = vcmp.ge.f32.partialorder %v2272, 0.0
      %vm2305 = vcmp.ge.f32.partialorder %v2273, 0.0
      %vm2306 = vcmp.ge.f32.partialorder %v2274, 0.0
      %vm2307 = vcmp.ge.f32.partialorder %v2275, 0.0
      %vm2308 = vcmp.ge.f32.partialorder %v2276, 0.0
      %vm2309 = vcmp.ge.f32.partialorder %v2277, 0.0
      %vm2310 = vcmp.ge.f32.partialorder %v2278, 0.0
      %vm2311 = vcmp.ge.f32.partialorder %v2279, 0.0
      %vm2312 = vcmp.ge.f32.partialorder %v2280, 0.0
      %v2313 = vmul.f32 %v2249, 0.2
      %v2314 = vmul.f32 %v2250, 0.2
      %v2315 = vmul.f32 %v2251, 0.2
      %v2316 = vmul.f32 %v2252, 0.2
      %v2317 = vmul.f32 %v2253, 0.2
      %v2318 = vmul.f32 %v2254, 0.2
      %v2319 = vmul.f32 %v2255, 0.2
      %v2320 = vmul.f32 %v2256, 0.2
      %v2321 = vmul.f32 %v2257, 0.2
      %v2322 = vmul.f32 %v2258, 0.2
      %v2323 = vmul.f32 %v2259, 0.2
      %v2324 = vmul.f32 %v2260, 0.2
      %v2325 = vmul.f32 %v2261, 0.2
      %v2326 = vmul.f32 %v2262, 0.2
      %v2327 = vmul.f32 %v2263, 0.2
      %v2328 = vmul.f32 %v2264, 0.2
      %v2329 = vmul.f32 %v2265, 0.2
      %v2330 = vmul.f32 %v2266, 0.2
      %v2331 = vmul.f32 %v2267, 0.2
      %v2332 = vmul.f32 %v2268, 0.2
      %v2333 = vmul.f32 %v2269, 0.2
      %v2334 = vmul.f32 %v2270, 0.2
      %v2335 = vmul.f32 %v2271, 0.2
      %v2336 = vmul.f32 %v2272, 0.2
      %v2337 = vmul.f32 %v2273, 0.2
      %v2338 = vmul.f32 %v2274, 0.2
      %v2339 = vmul.f32 %v2275, 0.2
      %v2340 = vmul.f32 %v2276, 0.2
      %v2341 = vmul.f32 %v2277, 0.2
      %v2342 = vmul.f32 %v2278, 0.2
      %v2343 = vmul.f32 %v2279, 0.2
      %v2344 = vmul.f32 %v2280, 0.2
      %v2345 = vsel %vm2281, %v2249, %v2313
      %v2346 = vsel %vm2282, %v2250, %v2314
      %v2347 = vsel %vm2283, %v2251, %v2315
      %v2348 = vsel %vm2284, %v2252, %v2316
      %v2349 = vsel %vm2285, %v2253, %v2317
      %v2350 = vsel %vm2286, %v2254, %v2318
      %v2351 = vsel %vm2287, %v2255, %v2319
      %v2352 = vsel %vm2288, %v2256, %v2320
      %v2353 = vsel %vm2289, %v2257, %v2321
      %v2354 = vsel %vm2290, %v2258, %v2322
      %v2355 = vsel %vm2291, %v2259, %v2323
      %v2356 = vsel %vm2292, %v2260, %v2324
      %v2357 = vsel %vm2293, %v2261, %v2325
      %v2358 = vsel %vm2294, %v2262, %v2326
      %v2359 = vsel %vm2295, %v2263, %v2327
      %v2360 = vsel %vm2296, %v2264, %v2328
      %v2361 = vsel %vm2297, %v2265, %v2329
      %v2362 = vsel %vm2298, %v2266, %v2330
      %v2363 = vsel %vm2299, %v2267, %v2331
      %v2364 = vsel %vm2300, %v2268, %v2332
      %v2365 = vsel %vm2301, %v2269, %v2333
      %v2366 = vsel %vm2302, %v2270, %v2334
      %v2367 = vsel %vm2303, %v2271, %v2335
      %v2368 = vsel %vm2304, %v2272, %v2336
      %v2369 = vsel %vm2305, %v2273, %v2337
      %v2370 = vsel %vm2306, %v2274, %v2338
      %v2371 = vsel %vm2307, %v2275, %v2339
      %v2372 = vsel %vm2308, %v2276, %v2340
      %v2373 = vsel %vm2309, %v2277, %v2341
      %v2374 = vsel %vm2310, %v2278, %v2342
      %v2375 = vsel %vm2311, %v2279, %v2343
      %v2376 = vsel %vm2312, %v2280, %v2344
      %vm2377 = vcmask 261120
      %2378 = vst.msk [vmem:[%s170] sm:$0xff] %vm2377, %v2345
      %2379 = vst.msk [vmem:[%s170 + $0x8] sm:$0xff] %vm2377, %v2346
      %2380 = vst.msk [vmem:[%s170 + $0x10] sm:$0xff] %vm2377, %v2347
      %2381 = vst.msk [vmem:[%s170 + $0x18] sm:$0xff] %vm2377, %v2348
      %2382 = vst.msk [vmem:[%s170 + $0x20] sm:$0xff] %vm2377, %v2349
      %2383 = vst.msk [vmem:[%s170 + $0x28] sm:$0xff] %vm2377, %v2350
      %2384 = vst.msk [vmem:[%s170 + $0x30] sm:$0xff] %vm2377, %v2351
      %2385 = vst.msk [vmem:[%s170 + $0x38] sm:$0xff] %vm2377, %v2352
      %2386 = vst.msk [vmem:[%s170 + $0x40] sm:$0xff] %vm2377, %v2353
      %2387 = vst.msk [vmem:[%s170 + $0x48] sm:$0xff] %vm2377, %v2354
      %2388 = vst.msk [vmem:[%s170 + $0x50] sm:$0xff] %vm2377, %v2355
      %2389 = vst.msk [vmem:[%s170 + $0x58] sm:$0xff] %vm2377, %v2356
      %2390 = vst.msk [vmem:[%s170 + $0x60] sm:$0xff] %vm2377, %v2357
      %2391 = vst.msk [vmem:[%s170 + $0x68] sm:$0xff] %vm2377, %v2358
      %2392 = vst.msk [vmem:[%s170 + $0x70] sm:$0xff] %vm2377, %v2359
      %2393 = vst.msk [vmem:[%s170 + $0x78] sm:$0xff] %vm2377, %v2360
      %2394 = vst.msk [vmem:[%s170 + $0x80] sm:$0xff] %vm2377, %v2361
      %2395 = vst.msk [vmem:[%s170 + $0x88] sm:$0xff] %vm2377, %v2362
      %2396 = vst.msk [vmem:[%s170 + $0x90] sm:$0xff] %vm2377, %v2363
      %2397 = vst.msk [vmem:[%s170 + $0x98] sm:$0xff] %vm2377, %v2364
      %2398 = vst.msk [vmem:[%s170 + $0xa0] sm:$0xff] %vm2377, %v2365
      %2399 = vst.msk [vmem:[%s170 + $0xa8] sm:$0xff] %vm2377, %v2366
      %2400 = vst.msk [vmem:[%s170 + $0xb0] sm:$0xff] %vm2377, %v2367
      %2401 = vst.msk [vmem:[%s170 + $0xb8] sm:$0xff] %vm2377, %v2368
      %2402 = vst.msk [vmem:[%s170 + $0xc0] sm:$0xff] %vm2377, %v2369
      %2403 = vst.msk [vmem:[%s170 + $0xc8] sm:$0xff] %vm2377, %v2370
      %2404 = vst.msk [vmem:[%s170 + $0xd0] sm:$0xff] %vm2377, %v2371
      %2405 = vst.msk [vmem:[%s170 + $0xd8] sm:$0xff] %vm2377, %v2372
      %2406 = vst.msk [vmem:[%s170 + $0xe0] sm:$0xff] %vm2377, %v2373
      %2407 = vst.msk [vmem:[%s170 + $0xe8] sm:$0xff] %vm2377, %v2374
      %2408 = vst.msk [vmem:[%s170 + $0xf0] sm:$0xff] %vm2377, %v2375
      %2409 = vst.msk [vmem:[%s170 + $0xf8] sm:$0xff] %vm2377, %v2376
      %p2410 = scmp.lt.s32.totalorder %s14, 1
      %s2411 = scalar_select %p2410, %s14, 1
      %s2412 = smul.addr %s2411, 32
      %s2413 = smul.addr %s2412, 8
      %s2414 = scalar_lea.vmem %s3, %s2413
      // Predicated region
      $region33: #{tpu_custom_call.1} parent=31 // pred_check
        %p2415 = pneg %p100
      $region34: #{tpu_custom_call.1} parent=31 // pred_check_branch
        %2417 = sbr.rel (%p2415) target = $region36
      $region35: #{tpu_custom_call.1} parent=31 // pred_region
        _
      $region36: #{tpu_custom_call.1} parent=31 // pred_fallthru
        _
    $region32: #{tpu_custom_call.1} parent=5 // pred_fallthru
      _
    %p2418 = scmp.le.s32.totalorder 2, %s9
    // Predicated region
    $region37: #{tpu_custom_call.1} parent=5 // pred_check
      %p2419 = pneg %p2418
    $region38: #{tpu_custom_call.1} parent=5 // pred_check_branch
      %2421 = sbr.rel (%p2419) target = $region40
    $region39: #{tpu_custom_call.1} parent=5 // pred_region
      %s2422 = ssub.s32 %s9, 2
      // Predicated region
      $region41: #{tpu_custom_call.1} parent=39 // pred_check
        %p2423 = pneg %p106
      $region42: #{tpu_custom_call.1} parent=39 // pred_check_branch
        %2425 = sbr.rel (%p2423) target = $region44
      $region43: #{tpu_custom_call.1} parent=39 // pred_region
        %p2426 = scmp.lt.s32.totalorder %s15, 1
        %s2427 = scalar_select %p2426, %s15, 1
        %s2428 = smul.addr %s2427, 32
        %s2429 = smul.addr %s2428, 8
        %s2430 = scalar_lea.vmem %s3, %s2429
      $region44: #{tpu_custom_call.1} parent=39 // pred_fallthru
        _
    $region40: #{tpu_custom_call.1} parent=5 // pred_fallthru
      _
  $region6: #{tpu_custom_call.1} parent=0 // loop_footer
    %s13 = sadd.s32 1, %s9
  $region7: #{tpu_custom_call.1} parent=0 // loop_footer_branch
    %8 = sbr.rel target = $region3
  $region8: #{tpu_custom_call.1} parent=0 // loop_exit
    _

</llo_original>
